<compile_context>
chip_gen: v5e
topology: v5e:2x2
jax: 0.10.0
libtpu: 0.0.40
codegen_flags: <defaults>
</compile_context>

<pallas_src>
import jax
import jax.numpy as jnp
from jax.experimental import pallas as pl
from jax.experimental.pallas import tpu as pltpu

LANE = 128
SUBLANE_BF16 = 16


def _round_up(n, m):
    return ((n + m - 1) // m) * m


def mlp_kernel(x_ref,
               w1_ref, b1_ref,
               w2_ref, b2_ref,
               w3_ref, b3_ref,
               w4_ref, b4_ref,
               w5_ref, b5_ref,
               o_ref):
    # Layer 1: Linear + ReLU (bf16 MXU matmul, f32 accumulate / epilogue)
    y = jnp.dot(x_ref[...], w1_ref[...], preferred_element_type=jnp.float32)
    h = jnp.maximum(y + b1_ref[...], 0.0).astype(jnp.bfloat16)
    # Layer 2: Linear + ReLU
    y = jnp.dot(h, w2_ref[...], preferred_element_type=jnp.float32)
    h = jnp.maximum(y + b2_ref[...], 0.0).astype(jnp.bfloat16)
    # Layer 3: Linear + ReLU
    y = jnp.dot(h, w3_ref[...], preferred_element_type=jnp.float32)
    h = jnp.maximum(y + b3_ref[...], 0.0).astype(jnp.bfloat16)
    # Layer 4: Linear + ReLU
    y = jnp.dot(h, w4_ref[...], preferred_element_type=jnp.float32)
    h = jnp.maximum(y + b4_ref[...], 0.0).astype(jnp.bfloat16)
    # Layer 5: Linear (no activation)
    y = jnp.dot(h, w5_ref[...], preferred_element_type=jnp.float32)
    o_ref[...] = (y + b5_ref[...]).astype(o_ref.dtype)


def prepare_params(params):
    """One-time preparation: zero-pad + cast weights to bf16, biases to f32.

    Contraction / internal widths are rounded only to 16 (bf16 sublane
    packing); only the final output width is rounded to 128 (lane-dense HBM
    store).  Zero padding is exact for Linear(+ReLU).
    """
    n_feature = params[0][0].shape[0]
    n_output = params[-1][0].shape[1]
    widths = [n_feature] + [w.shape[1] for (w, _) in params]          # nf, h1..h4, out
    padded = [_round_up(d, SUBLANE_BF16) for d in widths[:-1]]
    padded.append(_round_up(widths[-1], LANE))                        # final out -> 128-mult

    flat = []
    shapes = []
    for li, (w, b) in enumerate(params):
        ip, op = padded[li], padded[li + 1]
        w_p = jnp.pad(w, ((0, ip - w.shape[0]), (0, op - w.shape[1])))
        b_p = jnp.pad(b.reshape(1, -1), ((0, 0), (0, op - w.shape[1])))
        flat.append(w_p.astype(jnp.bfloat16))
        flat.append(b_p.astype(jnp.float32))
        shapes.append((ip, op))

    meta = {"n_feature": n_feature, "n_output": n_output,
            "nf_pad": padded[0], "out_pad": padded[-1], "shapes": shapes}
    return flat, meta


def net_forward(x, prepared, *, tb=256):
    """x: (B, n_feature) f32; prepared: output of prepare_params()."""
    flat_params, meta = prepared
    B = x.shape[0]
    nf, nf_p = meta["n_feature"], meta["nf_pad"]
    out_p, n_out = meta["out_pad"], meta["n_output"]

    # Batch tile: multiple of 16 (bf16 sublane), capped at `tb`, and small
    # enough that the grid has >= 2 steps when B allows (v7x two-TC sharding).
    half = _round_up((B + 1) // 2, SUBLANE_BF16)
    tb_eff = max(SUBLANE_BF16, min(tb, half))
    B_pad = _round_up(B, tb_eff)

    # Only x (per-call activation) is padded/cast here; params are pre-made.
    x_p = jnp.pad(x, ((0, B_pad - B), (0, nf_p - nf))).astype(jnp.bfloat16)

    const = lambda i: (0, 0)   # weights/biases: one DMA, VMEM-resident all grid
    in_specs = [pl.BlockSpec((tb_eff, nf_p), lambda i: (i, 0))]
    for (ip, op) in meta["shapes"]:
        in_specs.append(pl.BlockSpec((ip, op), const))   # full-array weight block
        in_specs.append(pl.BlockSpec((1, op), const))    # full-array bias block

    out_padded = pl.pallas_call(
        mlp_kernel,
        out_shape=jax.ShapeDtypeStruct((B_pad, out_p), jnp.float32),
        grid=(B_pad // tb_eff,),
        in_specs=in_specs,
        out_specs=pl.BlockSpec((tb_eff, out_p), lambda i: (i, 0)),
        compiler_params=pltpu.CompilerParams(
            dimension_semantics=("parallel",),   # batch grid shards across TCs
            vmem_limit_bytes=32 << 20,           # ample headroom up to tb=512
        ),
    )(x_p, *flat_params)

    # Slice off batch / output padding.
    return out_padded[:B, :n_out]


def init_params(key, n_feature, n_hidden, n_output):
    """Deterministic PyTorch-Linear-style init: U(-1/sqrt(fan_in), 1/sqrt(fan_in))."""
    dims = [(n_feature, n_hidden),
            (n_hidden, 800),
            (800, 500),
            (500, n_hidden),
            (n_hidden, n_output)]
    params = []
    for (fan_in, fan_out) in dims:
        key, kw, kb = jax.random.split(key, 3)
        bound = 1.0 / jnp.sqrt(jnp.float32(fan_in))
        w = jax.random.uniform(kw, (fan_in, fan_out), jnp.float32, -bound, bound)
        b = jax.random.uniform(kb, (1, fan_out), jnp.float32, -bound, bound)
        params.append((w, b))
    return params


def reference_forward(x, params):
    """Reference matching the kernel's numerics: bf16 matmul inputs, f32 accumulate."""
    h = x.astype(jnp.bfloat16)
    n = len(params)
    for i, (w, b) in enumerate(params):
        y = jnp.dot(h, w.astype(jnp.bfloat16),
                    preferred_element_type=jnp.float32) + b.reshape(1, -1)
        if i < n - 1:
            h = jnp.maximum(y, 0.0).astype(jnp.bfloat16)
        else:
            h = y
    return h


if __name__ == "__main__":
    n_feature, n_hidden, n_output = 32, 32, 8
    batch = 8

    key = jax.random.PRNGKey(0)
    key, kx = jax.random.split(key)
    x = jax.random.normal(kx, (batch, n_feature), jnp.float32)
    params = init_params(key, n_feature, n_hidden, n_output)

    prepared = prepare_params(params)      # one-time pad + bf16 cast
    out = net_forward(x, prepared)
    out = jax.block_until_ready(out)

    ref = reference_forward(x, params)
    assert out.shape == (batch, n_output)
    assert jnp.allclose(out, ref, atol=1e-2, rtol=1e-2), "mismatch vs reference"

    print("KERNEL_OK")
</pallas_src>

<mosaic_0001>
module attributes {stable_mosaic.version = 11 : i64} {
  func.func @mlp_kernel(%arg0: i32, %arg1: memref<16x32xbf16, #tpu.memory_space<vmem>>, %arg2: memref<32x32xbf16, #tpu.memory_space<vmem>>, %arg3: memref<1x32xf32, #tpu.memory_space<vmem>>, %arg4: memref<32x800xbf16, #tpu.memory_space<vmem>>, %arg5: memref<1x800xf32, #tpu.memory_space<vmem>>, %arg6: memref<800x512xbf16, #tpu.memory_space<vmem>>, %arg7: memref<1x512xf32, #tpu.memory_space<vmem>>, %arg8: memref<512x32xbf16, #tpu.memory_space<vmem>>, %arg9: memref<1x32xf32, #tpu.memory_space<vmem>>, %arg10: memref<32x128xbf16, #tpu.memory_space<vmem>>, %arg11: memref<1x128xf32, #tpu.memory_space<vmem>>, %arg12: memref<16x128xf32, #tpu.memory_space<vmem>>) attributes {dimension_semantics = [#tpu.dimension_semantics<parallel>], iteration_bounds = array<i64: 1>, scalar_prefetch = 0 : i64, scratch_operands = 0 : i64, tpu.core_type = #tpu.core_type<tc>, window_params = [{transform_indices = @transform_0, window_bounds = array<i64: 16, 32>}, {pipeline_mode = #tpu.pipeline_mode<synchronous>, transform_indices = @transform_1, window_bounds = array<i64: 32, 32>}, {pipeline_mode = #tpu.pipeline_mode<synchronous>, transform_indices = @transform_2, window_bounds = array<i64: 1, 32>}, {pipeline_mode = #tpu.pipeline_mode<synchronous>, transform_indices = @transform_3, window_bounds = array<i64: 32, 800>}, {pipeline_mode = #tpu.pipeline_mode<synchronous>, transform_indices = @transform_4, window_bounds = array<i64: 1, 800>}, {pipeline_mode = #tpu.pipeline_mode<synchronous>, transform_indices = @transform_5, window_bounds = array<i64: 800, 512>}, {pipeline_mode = #tpu.pipeline_mode<synchronous>, transform_indices = @transform_6, window_bounds = array<i64: 1, 512>}, {pipeline_mode = #tpu.pipeline_mode<synchronous>, transform_indices = @transform_7, window_bounds = array<i64: 512, 32>}, {pipeline_mode = #tpu.pipeline_mode<synchronous>, transform_indices = @transform_8, window_bounds = array<i64: 1, 32>}, {pipeline_mode = #tpu.pipeline_mode<synchronous>, transform_indices = @transform_9, window_bounds = array<i64: 32, 128>}, {pipeline_mode = #tpu.pipeline_mode<synchronous>, transform_indices = @transform_10, window_bounds = array<i64: 1, 128>}, {transform_indices = @transform_11, window_bounds = array<i64: 16, 128>}]} {
    %c0 = arith.constant 0 : index
    %c0_0 = arith.constant 0 : index
    %0 = vector.load %arg1[%c0, %c0_0] : memref<16x32xbf16, #tpu.memory_space<vmem>>, vector<16x32xbf16>
    %c0_1 = arith.constant 0 : index
    %c0_2 = arith.constant 0 : index
    %1 = vector.load %arg2[%c0_1, %c0_2] : memref<32x32xbf16, #tpu.memory_space<vmem>>, vector<32x32xbf16>
    %cst = arith.constant dense<0.000000e+00> : vector<16x32xf32>
    %2 = tpu.matmul %0, %1, %cst {dimension_numbers = #tpu.dot_dimension_numbers<[1], [0], [0], [1], [0, 0, 1, 1], [], []>} : vector<16x32xbf16>, vector<32x32xbf16>, vector<16x32xf32> -> vector<16x32xf32>
    %c0_3 = arith.constant 0 : index
    %c0_4 = arith.constant 0 : index
    %3 = vector.load %arg3[%c0_3, %c0_4] : memref<1x32xf32, #tpu.memory_space<vmem>>, vector<1x32xf32>
    %4 = vector.broadcast %3 : vector<1x32xf32> to vector<16x32xf32>
    %5 = arith.addf %2, %4 : vector<16x32xf32>
    %cst_5 = arith.constant 0.000000e+00 : f32
    %6 = vector.broadcast %cst_5 : f32 to vector<16x32xf32>
    %7 = arith.maximumf %5, %6 : vector<16x32xf32>
    %8 = arith.truncf %7 : vector<16x32xf32> to vector<16x32xbf16>
    %c0_6 = arith.constant 0 : index
    %c0_7 = arith.constant 0 : index
    %9 = vector.load %arg4[%c0_6, %c0_7] : memref<32x800xbf16, #tpu.memory_space<vmem>>, vector<32x800xbf16>
    %cst_8 = arith.constant dense<0.000000e+00> : vector<16x800xf32>
    %10 = tpu.matmul %8, %9, %cst_8 {dimension_numbers = #tpu.dot_dimension_numbers<[1], [0], [0], [1], [0, 0, 1, 1], [], []>} : vector<16x32xbf16>, vector<32x800xbf16>, vector<16x800xf32> -> vector<16x800xf32>
    %c0_9 = arith.constant 0 : index
    %c0_10 = arith.constant 0 : index
    %11 = vector.load %arg5[%c0_9, %c0_10] : memref<1x800xf32, #tpu.memory_space<vmem>>, vector<1x800xf32>
    %12 = vector.broadcast %11 : vector<1x800xf32> to vector<16x800xf32>
    %13 = arith.addf %10, %12 : vector<16x800xf32>
    %cst_11 = arith.constant 0.000000e+00 : f32
    %14 = vector.broadcast %cst_11 : f32 to vector<16x800xf32>
    %15 = arith.maximumf %13, %14 : vector<16x800xf32>
    %16 = arith.truncf %15 : vector<16x800xf32> to vector<16x800xbf16>
    %c0_12 = arith.constant 0 : index
    %c0_13 = arith.constant 0 : index
    %17 = vector.load %arg6[%c0_12, %c0_13] : memref<800x512xbf16, #tpu.memory_space<vmem>>, vector<800x512xbf16>
    %cst_14 = arith.constant dense<0.000000e+00> : vector<16x512xf32>
    %18 = tpu.matmul %16, %17, %cst_14 {dimension_numbers = #tpu.dot_dimension_numbers<[1], [0], [0], [1], [0, 0, 1, 1], [], []>} : vector<16x800xbf16>, vector<800x512xbf16>, vector<16x512xf32> -> vector<16x512xf32>
    %c0_15 = arith.constant 0 : index
    %c0_16 = arith.constant 0 : index
    %19 = vector.load %arg7[%c0_15, %c0_16] : memref<1x512xf32, #tpu.memory_space<vmem>>, vector<1x512xf32>
    %20 = vector.broadcast %19 : vector<1x512xf32> to vector<16x512xf32>
    %21 = arith.addf %18, %20 : vector<16x512xf32>
    %cst_17 = arith.constant 0.000000e+00 : f32
    %22 = vector.broadcast %cst_17 : f32 to vector<16x512xf32>
    %23 = arith.maximumf %21, %22 : vector<16x512xf32>
    %24 = arith.truncf %23 : vector<16x512xf32> to vector<16x512xbf16>
    %c0_18 = arith.constant 0 : index
    %c0_19 = arith.constant 0 : index
    %25 = vector.load %arg8[%c0_18, %c0_19] : memref<512x32xbf16, #tpu.memory_space<vmem>>, vector<512x32xbf16>
    %cst_20 = arith.constant dense<0.000000e+00> : vector<16x32xf32>
    %26 = tpu.matmul %24, %25, %cst_20 {dimension_numbers = #tpu.dot_dimension_numbers<[1], [0], [0], [1], [0, 0, 1, 1], [], []>} : vector<16x512xbf16>, vector<512x32xbf16>, vector<16x32xf32> -> vector<16x32xf32>
    %c0_21 = arith.constant 0 : index
    %c0_22 = arith.constant 0 : index
    %27 = vector.load %arg9[%c0_21, %c0_22] : memref<1x32xf32, #tpu.memory_space<vmem>>, vector<1x32xf32>
    %28 = vector.broadcast %27 : vector<1x32xf32> to vector<16x32xf32>
    %29 = arith.addf %26, %28 : vector<16x32xf32>
    %cst_23 = arith.constant 0.000000e+00 : f32
    %30 = vector.broadcast %cst_23 : f32 to vector<16x32xf32>
    %31 = arith.maximumf %29, %30 : vector<16x32xf32>
    %32 = arith.truncf %31 : vector<16x32xf32> to vector<16x32xbf16>
    %c0_24 = arith.constant 0 : index
    %c0_25 = arith.constant 0 : index
    %33 = vector.load %arg10[%c0_24, %c0_25] : memref<32x128xbf16, #tpu.memory_space<vmem>>, vector<32x128xbf16>
    %cst_26 = arith.constant dense<0.000000e+00> : vector<16x128xf32>
    %34 = tpu.matmul %32, %33, %cst_26 {dimension_numbers = #tpu.dot_dimension_numbers<[1], [0], [0], [1], [0, 0, 1, 1], [], []>} : vector<16x32xbf16>, vector<32x128xbf16>, vector<16x128xf32> -> vector<16x128xf32>
    %c0_27 = arith.constant 0 : index
    %c0_28 = arith.constant 0 : index
    %35 = vector.load %arg11[%c0_27, %c0_28] : memref<1x128xf32, #tpu.memory_space<vmem>>, vector<1x128xf32>
    %36 = vector.broadcast %35 : vector<1x128xf32> to vector<16x128xf32>
    %37 = arith.addf %34, %36 : vector<16x128xf32>
    %c0_29 = arith.constant 0 : index
    %c0_30 = arith.constant 0 : index
    %38 = vector.load %arg12[%c0_29, %c0_30] : memref<16x128xf32, #tpu.memory_space<vmem>>, vector<16x128xf32>
    tpu.vector_store %arg12[%c0_29, %c0_30], %37 {strides = array<i32>} : memref<16x128xf32, #tpu.memory_space<vmem>>, vector<16x128xf32>,
    return
  }
  func.func @transform_0(%arg0: i32) -> (i32, i32) {
    %c0_i32 = arith.constant 0 : i32
    %c0_i32_0 = arith.constant 0 : i32
    return %arg0, %c0_i32 : i32, i32
  }
  func.func @transform_1(%arg0: i32) -> (i32, i32) {
    %c0_i32 = arith.constant 0 : i32
    %c0_i32_0 = arith.constant 0 : i32
    %c0_i32_1 = arith.constant 0 : i32
    return %c0_i32, %c0_i32_0 : i32, i32
  }
  func.func @transform_2(%arg0: i32) -> (i32, i32) {
    %c0_i32 = arith.constant 0 : i32
    %c0_i32_0 = arith.constant 0 : i32
    %c0_i32_1 = arith.constant 0 : i32
    return %c0_i32, %c0_i32_0 : i32, i32
  }
  func.func @transform_3(%arg0: i32) -> (i32, i32) {
    %c0_i32 = arith.constant 0 : i32
    %c0_i32_0 = arith.constant 0 : i32
    %c0_i32_1 = arith.constant 0 : i32
    return %c0_i32, %c0_i32_0 : i32, i32
  }
  func.func @transform_4(%arg0: i32) -> (i32, i32) {
    %c0_i32 = arith.constant 0 : i32
    %c0_i32_0 = arith.constant 0 : i32
    %c0_i32_1 = arith.constant 0 : i32
    return %c0_i32, %c0_i32_0 : i32, i32
  }
  func.func @transform_5(%arg0: i32) -> (i32, i32) {
    %c0_i32 = arith.constant 0 : i32
    %c0_i32_0 = arith.constant 0 : i32
    %c0_i32_1 = arith.constant 0 : i32
    return %c0_i32, %c0_i32_0 : i32, i32
  }
  func.func @transform_6(%arg0: i32) -> (i32, i32) {
    %c0_i32 = arith.constant 0 : i32
    %c0_i32_0 = arith.constant 0 : i32
    %c0_i32_1 = arith.constant 0 : i32
    return %c0_i32, %c0_i32_0 : i32, i32
  }
  func.func @transform_7(%arg0: i32) -> (i32, i32) {
    %c0_i32 = arith.constant 0 : i32
    %c0_i32_0 = arith.constant 0 : i32
    %c0_i32_1 = arith.constant 0 : i32
    return %c0_i32, %c0_i32_0 : i32, i32
  }
  func.func @transform_8(%arg0: i32) -> (i32, i32) {
    %c0_i32 = arith.constant 0 : i32
    %c0_i32_0 = arith.constant 0 : i32
    %c0_i32_1 = arith.constant 0 : i32
    return %c0_i32, %c0_i32_0 : i32, i32
  }
  func.func @transform_9(%arg0: i32) -> (i32, i32) {
    %c0_i32 = arith.constant 0 : i32
    %c0_i32_0 = arith.constant 0 : i32
    %c0_i32_1 = arith.constant 0 : i32
    return %c0_i32, %c0_i32_0 : i32, i32
  }
  func.func @transform_10(%arg0: i32) -> (i32, i32) {
    %c0_i32 = arith.constant 0 : i32
    %c0_i32_0 = arith.constant 0 : i32
    %c0_i32_1 = arith.constant 0 : i32
    return %c0_i32, %c0_i32_0 : i32, i32
  }
  func.func @transform_11(%arg0: i32) -> (i32, i32) {
    %c0_i32 = arith.constant 0 : i32
    %c0_i32_0 = arith.constant 0 : i32
    return %arg0, %c0_i32 : i32, i32
  }
}

</mosaic_0001>

<llo_original>
// kernel: tpu_custom_call.1
$region0: #{tpu_custom_call.1}
  #allocation0 [shape = 'u32[]', space=smem, size = 0x4, offset = 0x4, fixed_abs, tag = 'smem constant byte address 0x4 - core index']
  #allocation1 [shape = 'u32[72,128]{1,0:T(1,128)}', space=vmem, size = 0x9000, scoped, tag = 'internal scratch']
  %s0 = inlined_call_operand.vmem [shape: bf16[16,32], index: 0, kind: input, shape index: {}]
  %s1 = inlined_call_operand.vmem [shape: bf16[32,32], index: 1, kind: input, shape index: {}]
  %s2 = inlined_call_operand.vmem [shape: f32[1,32], index: 2, kind: input, shape index: {}]
  %s3 = inlined_call_operand.vmem [shape: bf16[32,800], index: 3, kind: input, shape index: {}]
  %s4 = inlined_call_operand.vmem [shape: f32[1,800], index: 4, kind: input, shape index: {}]
  %s5 = inlined_call_operand.hbm [shape: bf16[800,512], index: 5, kind: input, shape index: {}]
  %s6 = inlined_call_operand.vmem [shape: f32[1,512], index: 6, kind: input, shape index: {}]
  %s7 = inlined_call_operand.vmem [shape: bf16[512,32], index: 7, kind: input, shape index: {}]
  %s8 = inlined_call_operand.vmem [shape: f32[1,32], index: 8, kind: input, shape index: {}]
  %s9 = inlined_call_operand.vmem [shape: bf16[32,128], index: 9, kind: input, shape index: {}]
  %s10 = inlined_call_operand.vmem [shape: f32[1,128], index: 10, kind: input, shape index: {}]
  %s11 = inlined_call_operand.hbm [shape: f32[16,128], index: 11, kind: output, shape index: {}]
  %s12 = sld [smem:[#allocation0]]
  $region58: #{tpu_custom_call.1} parent=0
    _
  %s14 = ssub.s32 1, %s12
  %s15 = scalar_select 0, %s14, %s12
  $region1: #{tpu_custom_call.1} parent=0
    #allocation2 [shape = 'u8[819200]{0}', space=vmem, size = 0xc8000, scoped, tag = 'input window, operand 5, single buffered']
    #allocation3 [shape = 's32[1]{0}', space=sflag, size = 0x4, scoped, tag = 'scoped memory for tpu_custom_call.1']
    #allocation4 [shape = 's32[1]{0}', space=sflag, size = 0x4, scoped, tag = 'scoped memory for tpu_custom_call.1']
    #allocation5 [shape = 'u8[8192]{0}', space=vmem, size = 0x2000, scoped, tag = 'output window, operand 0, single buffered']
    %16 = vsyncpa [#allocation3], 0
    %17 = vsyncpa [#allocation4], 0
    // Predicated region
    $region2: #{tpu_custom_call.1} parent=1 // pred_check
      _
    $region3: #{tpu_custom_call.1} parent=1 // pred_check_branch
      %19 = sbr.rel (0) target = $region5
    $region4: #{tpu_custom_call.1} parent=1 // pred_region
      _
    $region5: #{tpu_custom_call.1} parent=1 // pred_fallthru
      _
    // Predicated region
    $region6: #{tpu_custom_call.1} parent=1 // pred_check
      _
    $region7: #{tpu_custom_call.1} parent=1 // pred_check_branch
      %21 = sbr.rel (0) target = $region9
    $region8: #{tpu_custom_call.1} parent=1 // pred_region
      _
    $region9: #{tpu_custom_call.1} parent=1 // pred_fallthru
      _
    // Predicated region
    $region10: #{tpu_custom_call.1} parent=1 // pred_check
      _
    $region11: #{tpu_custom_call.1} parent=1 // pred_check_branch
      %23 = sbr.rel (0) target = $region13
    $region12: #{tpu_custom_call.1} parent=1 // pred_region
      _
    $region13: #{tpu_custom_call.1} parent=1 // pred_fallthru
      _
    // Predicated region
    $region14: #{tpu_custom_call.1} parent=1 // pred_check
      _
    $region15: #{tpu_custom_call.1} parent=1 // pred_check_branch
      %25 = sbr.rel (0) target = $region17
    $region16: #{tpu_custom_call.1} parent=1 // pred_region
      _
    $region17: #{tpu_custom_call.1} parent=1 // pred_fallthru
      _
    // Predicated region
    $region18: #{tpu_custom_call.1} parent=1 // pred_check
      _
    $region19: #{tpu_custom_call.1} parent=1 // pred_check_branch
      %27 = sbr.rel (0) target = $region21
    $region20: #{tpu_custom_call.1} parent=1 // pred_region
      _
    $region21: #{tpu_custom_call.1} parent=1 // pred_fallthru
      _
    // Predicated region
    $region22: #{tpu_custom_call.1} parent=1 // pred_check
      _
    $region23: #{tpu_custom_call.1} parent=1 // pred_check_branch
      %29 = sbr.rel (0) target = $region25
    $region24: #{tpu_custom_call.1} parent=1 // pred_region
      %31 = vsyncadd [#allocation3], 0
      %s32 = sshll.u32 %s5, 4
      %s33 = int_to_ptr.hbm [resolvable:$true] %s32
      %s34 = sshll.u32 [#allocation2], 4
      %s35 = int_to_ptr.vmem [resolvable:$true] %s34
      %40 = dma.hbm_to_vmem [thread:$0]  %s33, 25600, %s35, [#allocation3], 256, 256, 16
    $region25: #{tpu_custom_call.1} parent=1 // pred_fallthru
      _
    // Predicated region
    $region26: #{tpu_custom_call.1} parent=1 // pred_check
      _
    $region27: #{tpu_custom_call.1} parent=1 // pred_check_branch
      %42 = sbr.rel (0) target = $region29
    $region28: #{tpu_custom_call.1} parent=1 // pred_region
      _
    $region29: #{tpu_custom_call.1} parent=1 // pred_fallthru
      _
    // Predicated region
    $region30: #{tpu_custom_call.1} parent=1 // pred_check
      _
    $region31: #{tpu_custom_call.1} parent=1 // pred_check_branch
      %44 = sbr.rel (0) target = $region33
    $region32: #{tpu_custom_call.1} parent=1 // pred_region
      _
    $region33: #{tpu_custom_call.1} parent=1 // pred_fallthru
      _
    // Predicated region
    $region34: #{tpu_custom_call.1} parent=1 // pred_check
      _
    $region35: #{tpu_custom_call.1} parent=1 // pred_check_branch
      %46 = sbr.rel (0) target = $region37
    $region36: #{tpu_custom_call.1} parent=1 // pred_region
      _
    $region37: #{tpu_custom_call.1} parent=1 // pred_fallthru
      _
    // Predicated region
    $region38: #{tpu_custom_call.1} parent=1 // pred_check
      _
    $region39: #{tpu_custom_call.1} parent=1 // pred_check_branch
      %48 = sbr.rel (0) target = $region41
    $region40: #{tpu_custom_call.1} parent=1 // pred_region
      _
    $region41: #{tpu_custom_call.1} parent=1 // pred_fallthru
      _
    // Predicated region
    $region42: #{tpu_custom_call.1} parent=1 // pred_check
      _
    $region43: #{tpu_custom_call.1} parent=1 // pred_check_branch
      %50 = sbr.rel (0) target = $region45
    $region44: #{tpu_custom_call.1} parent=1 // pred_region
      _
    $region45: #{tpu_custom_call.1} parent=1 // pred_fallthru
      _
    // Predicated region
    $region46: #{tpu_custom_call.1} parent=1 // pred_check
      _
    $region47: #{tpu_custom_call.1} parent=1 // pred_check_branch
      %52 = sbr.rel (0) target = $region49
    $region48: #{tpu_custom_call.1} parent=1 // pred_region
      %54 = dma.done [#allocation3], 25600
    $region49: #{tpu_custom_call.1} parent=1 // pred_fallthru
      _
    %v56 = vld [vmem:[%s0] sm:$0xf]
    %v57 = vld [vmem:[%s0 + $0x4] sm:$0xf]
    %v58 = vld [vmem:[%s1] sm:$0xf]
    %v59 = vld [vmem:[%s1 + $0x4] sm:$0xf]
    %v60 = vld [vmem:[%s1 + $0x8] sm:$0xf]
    %v61 = vld [vmem:[%s1 + $0xc] sm:$0xf]
    %v62 = vld [vmem:[%s2] sm:$0x1]
    %v64 = vperm.slane %v62, 0
    %v68 = vunpack.c.l.b16 %v56
    %v69 = vunpack.c.l.b16 %v57
    %v70 = vpack.c.b16 %v69, %v68
    %v75 = vunpack.c.l.b16 %v58
    %v76 = vunpack.c.l.b16 %v59
    %v77 = vunpack.c.l.b16 %v60
    %v78 = vunpack.c.l.b16 %v61
    %v79 = vpack.c.b16 %v76, %v75
    %v80 = vpack.c.b16 %v78, %v77
    %vm83 = vcmask 261120
    %v85 = vsel %vm83, %v70, 0
    %87 = vmatpush.bf16.msra.mxu0 0
    %88 = vmatpush.bf16.msra.mxu0 0
    %89 = vmatpush.bf16.msra.mxu0 0
    %90 = vmatpush.bf16.msra.mxu0 0
    %91 = vmatpush.bf16.msra.mxu0 0
    %92 = vmatpush.bf16.msra.mxu0 0
    %93 = vmatpush.bf16.msra.mxu0 %v80
    %94 = vmatpush.bf16.msra.mxu0 %v79
    %95 = vmatmul.bf16.gmra.mxu0 %v85
    %v96 = vpop.f32.mrf.mxu0
    %v97 = vadd.f32 %v64, %v96
    %v98 = vpop.f32.mrf.mxu0
    %v99 = vadd.f32 %v64, %v98
    %100 = vdwg.mxu0
    %v101 = vmax.f32 %v97, 0.0
    %v102 = vmax.f32 %v99, 0.0
    %v103 = vpack.c.bf16 %v102, %v101
    %v104 = vld [vmem:[%s3] sm:$0xff]
    %v105 = vld [vmem:[%s3 + $0x8] sm:$0xff]
    %v106 = vld [vmem:[%s3 + $0x10] sm:$0xff]
    %v107 = vld [vmem:[%s3 + $0x18] sm:$0xf]
    %v108 = vld [vmem:[%s3 + $0x1c] sm:$0xff]
    %v109 = vld [vmem:[%s3 + $0x24] sm:$0xff]
    %v110 = vld [vmem:[%s3 + $0x2c] sm:$0xff]
    %v111 = vld [vmem:[%s3 + $0x34] sm:$0xf]
    %v112 = vld [vmem:[%s3 + $0x38] sm:$0xff]
    %v113 = vld [vmem:[%s3 + $0x40] sm:$0xff]
    %v114 = vld [vmem:[%s3 + $0x48] sm:$0xff]
    %v115 = vld [vmem:[%s3 + $0x50] sm:$0xf]
    %v116 = vld [vmem:[%s3 + $0x54] sm:$0xff]
    %v117 = vld [vmem:[%s3 + $0x5c] sm:$0xff]
    %v118 = vld [vmem:[%s3 + $0x64] sm:$0xff]
    %v119 = vld [vmem:[%s3 + $0x6c] sm:$0xf]
    %v120 = vld [vmem:[%s4] sm:$0x7f]
    %v122 = vperm.slane %v120, 0
    %v123 = vperm.slane %v120, 1
    %v124 = vperm.slane %v120, 2
    %v125 = vperm.slane %v120, 3
    %v126 = vperm.slane %v120, 4
    %v127 = vperm.slane %v120, 5
    %v128 = vperm.slane %v120, 6
    %v152 = vunpack.c.l.b16 %v104
    %v153 = vunpack.c.h.b16 %v104
    %v154 = vunpack.c.l.b16 %v105
    %v155 = vunpack.c.h.b16 %v105
    %v156 = vunpack.c.l.b16 %v106
    %v157 = vunpack.c.h.b16 %v106
    %v158 = vunpack.c.l.b16 %v107
    %v159 = vunpack.c.l.b16 %v108
    %v160 = vunpack.c.h.b16 %v108
    %v161 = vunpack.c.l.b16 %v109
    %v162 = vunpack.c.h.b16 %v109
    %v163 = vunpack.c.l.b16 %v110
    %v164 = vunpack.c.h.b16 %v110
    %v165 = vunpack.c.l.b16 %v111
    %v166 = vunpack.c.l.b16 %v112
    %v167 = vunpack.c.h.b16 %v112
    %v168 = vunpack.c.l.b16 %v113
    %v169 = vunpack.c.h.b16 %v113
    %v170 = vunpack.c.l.b16 %v114
    %v171 = vunpack.c.h.b16 %v114
    %v172 = vunpack.c.l.b16 %v115
    %v173 = vunpack.c.l.b16 %v116
    %v174 = vunpack.c.h.b16 %v116
    %v175 = vunpack.c.l.b16 %v117
    %v176 = vunpack.c.h.b16 %v117
    %v177 = vunpack.c.l.b16 %v118
    %v178 = vunpack.c.h.b16 %v118
    %v179 = vunpack.c.l.b16 %v119
    %v180 = vpack.c.b16 %v159, %v152
    %v181 = vpack.c.b16 %v160, %v153
    %v182 = vpack.c.b16 %v161, %v154
    %v183 = vpack.c.b16 %v162, %v155
    %v184 = vpack.c.b16 %v163, %v156
    %v185 = vpack.c.b16 %v164, %v157
    %v186 = vpack.c.b16 %v165, %v158
    %v187 = vpack.c.b16 %v173, %v166
    %v188 = vpack.c.b16 %v174, %v167
    %v189 = vpack.c.b16 %v175, %v168
    %v190 = vpack.c.b16 %v176, %v169
    %v191 = vpack.c.b16 %v177, %v170
    %v192 = vpack.c.b16 %v178, %v171
    %v193 = vpack.c.b16 %v179, %v172
    %v209 = vsel %vm83, %v103, 0
    %211 = vmatpush.bf16.msra.mxu0 0
    %212 = vmatpush.bf16.msra.mxu0 0
    %213 = vmatpush.bf16.msra.mxu0 0
    %214 = vmatpush.bf16.msra.mxu0 0
    %215 = vmatpush.bf16.msra.mxu0 0
    %216 = vmatpush.bf16.msra.mxu0 0
    %217 = vmatpush.bf16.msra.mxu0 %v187
    %218 = vmatpush.bf16.msra.mxu0 %v180
    %219 = vmatmul.bf16.gmra.mxu0 %v209
    %v220 = vpop.f32.mrf.mxu0
    %v221 = vadd.f32 %v122, %v220
    %v222 = vpop.f32.mrf.mxu0
    %v223 = vadd.f32 %v122, %v222
    %224 = vdwg.mxu0
    %225 = vmatpush.bf16.msra.mxu0 0
    %226 = vmatpush.bf16.msra.mxu0 0
    %227 = vmatpush.bf16.msra.mxu0 0
    %228 = vmatpush.bf16.msra.mxu0 0
    %229 = vmatpush.bf16.msra.mxu0 0
    %230 = vmatpush.bf16.msra.mxu0 0
    %231 = vmatpush.bf16.msra.mxu0 %v188
    %232 = vmatpush.bf16.msra.mxu0 %v181
    %233 = vmatmul.bf16.gmra.mxu0 %v209
    %v234 = vpop.f32.mrf.mxu0
    %v235 = vadd.f32 %v123, %v234
    %v236 = vpop.f32.mrf.mxu0
    %v237 = vadd.f32 %v123, %v236
    %238 = vdwg.mxu0
    %239 = vmatpush.bf16.msra.mxu0 0
    %240 = vmatpush.bf16.msra.mxu0 0
    %241 = vmatpush.bf16.msra.mxu0 0
    %242 = vmatpush.bf16.msra.mxu0 0
    %243 = vmatpush.bf16.msra.mxu0 0
    %244 = vmatpush.bf16.msra.mxu0 0
    %245 = vmatpush.bf16.msra.mxu0 %v189
    %246 = vmatpush.bf16.msra.mxu0 %v182
    %247 = vmatmul.bf16.gmra.mxu0 %v209
    %v248 = vpop.f32.mrf.mxu0
    %v249 = vadd.f32 %v124, %v248
    %v250 = vpop.f32.mrf.mxu0
    %v251 = vadd.f32 %v124, %v250
    %252 = vdwg.mxu0
    %253 = vmatpush.bf16.msra.mxu0 0
    %254 = vmatpush.bf16.msra.mxu0 0
    %255 = vmatpush.bf16.msra.mxu0 0
    %256 = vmatpush.bf16.msra.mxu0 0
    %257 = vmatpush.bf16.msra.mxu0 0
    %258 = vmatpush.bf16.msra.mxu0 0
    %259 = vmatpush.bf16.msra.mxu0 %v190
    %260 = vmatpush.bf16.msra.mxu0 %v183
    %261 = vmatmul.bf16.gmra.mxu0 %v209
    %v262 = vpop.f32.mrf.mxu0
    %v263 = vadd.f32 %v125, %v262
    %v264 = vpop.f32.mrf.mxu0
    %v265 = vadd.f32 %v125, %v264
    %266 = vdwg.mxu0
    %267 = vmatpush.bf16.msra.mxu0 0
    %268 = vmatpush.bf16.msra.mxu0 0
    %269 = vmatpush.bf16.msra.mxu0 0
    %270 = vmatpush.bf16.msra.mxu0 0
    %271 = vmatpush.bf16.msra.mxu0 0
    %272 = vmatpush.bf16.msra.mxu0 0
    %273 = vmatpush.bf16.msra.mxu0 %v191
    %274 = vmatpush.bf16.msra.mxu0 %v184
    %275 = vmatmul.bf16.gmra.mxu0 %v209
    %v276 = vpop.f32.mrf.mxu0
    %v277 = vadd.f32 %v126, %v276
    %v278 = vpop.f32.mrf.mxu0
    %v279 = vadd.f32 %v126, %v278
    %280 = vdwg.mxu0
    %281 = vmatpush.bf16.msra.mxu0 0
    %282 = vmatpush.bf16.msra.mxu0 0
    %283 = vmatpush.bf16.msra.mxu0 0
    %284 = vmatpush.bf16.msra.mxu0 0
    %285 = vmatpush.bf16.msra.mxu0 0
    %286 = vmatpush.bf16.msra.mxu0 0
    %287 = vmatpush.bf16.msra.mxu0 %v192
    %288 = vmatpush.bf16.msra.mxu0 %v185
    %289 = vmatmul.bf16.gmra.mxu0 %v209
    %v290 = vpop.f32.mrf.mxu0
    %v291 = vadd.f32 %v127, %v290
    %v292 = vpop.f32.mrf.mxu0
    %v293 = vadd.f32 %v127, %v292
    %294 = vdwg.mxu0
    %295 = vmatpush.bf16.msra.mxu0 0
    %296 = vmatpush.bf16.msra.mxu0 0
    %297 = vmatpush.bf16.msra.mxu0 0
    %298 = vmatpush.bf16.msra.mxu0 0
    %299 = vmatpush.bf16.msra.mxu0 0
    %300 = vmatpush.bf16.msra.mxu0 0
    %301 = vmatpush.bf16.msra.mxu0 %v193
    %302 = vmatpush.bf16.msra.mxu0 %v186
    %303 = vmatmul.bf16.gmra.mxu0 %v209
    %v304 = vpop.f32.mrf.mxu0
    %v305 = vadd.f32 %v128, %v304
    %v306 = vpop.f32.mrf.mxu0
    %v307 = vadd.f32 %v128, %v306
    %308 = vdwg.mxu0
    %v309 = vmax.f32 %v221, 0.0
    %v310 = vmax.f32 %v235, 0.0
    %v311 = vmax.f32 %v249, 0.0
    %v312 = vmax.f32 %v263, 0.0
    %v313 = vmax.f32 %v277, 0.0
    %v314 = vmax.f32 %v291, 0.0
    %v315 = vmax.f32 %v305, 0.0
    %v316 = vmax.f32 %v223, 0.0
    %v317 = vmax.f32 %v237, 0.0
    %v318 = vmax.f32 %v251, 0.0
    %v319 = vmax.f32 %v265, 0.0
    %v320 = vmax.f32 %v279, 0.0
    %v321 = vmax.f32 %v293, 0.0
    %v322 = vmax.f32 %v307, 0.0
    %v323 = vpack.c.bf16 %v316, %v309
    %v324 = vpack.c.bf16 %v317, %v310
    %v325 = vpack.c.bf16 %v318, %v311
    %v326 = vpack.c.bf16 %v319, %v312
    %v327 = vpack.c.bf16 %v320, %v313
    %v328 = vpack.c.bf16 %v321, %v314
    %v329 = vpack.c.bf16 %v322, %v315
    %v330 = vld [vmem:[#allocation2] sm:$0xff]
    %v331 = vld [vmem:[#allocation2 + $0x8] sm:$0xff]
    %v332 = vld [vmem:[#allocation2 + $0x10] sm:$0xff]
    %v333 = vld [vmem:[#allocation2 + $0x18] sm:$0xff]
    %v334 = vld [vmem:[#allocation2 + $0x20] sm:$0xff]
    %v335 = vld [vmem:[#allocation2 + $0x28] sm:$0xff]
    %v336 = vld [vmem:[#allocation2 + $0x30] sm:$0xff]
    %v337 = vld [vmem:[#allocation2 + $0x38] sm:$0xff]
    %v338 = vld [vmem:[#allocation2 + $0x40] sm:$0xff]
    %v339 = vld [vmem:[#allocation2 + $0x48] sm:$0xff]
    %v340 = vld [vmem:[#allocation2 + $0x50] sm:$0xff]
    %v341 = vld [vmem:[#allocation2 + $0x58] sm:$0xff]
    %v342 = vld [vmem:[#allocation2 + $0x60] sm:$0xff]
    %v343 = vld [vmem:[#allocation2 + $0x68] sm:$0xff]
    %v344 = vld [vmem:[#allocation2 + $0x70] sm:$0xff]
    %v345 = vld [vmem:[#allocation2 + $0x78] sm:$0xff]
    %v346 = vld [vmem:[#allocation2 + $0x80] sm:$0xff]
    %v347 = vld [vmem:[#allocation2 + $0x88] sm:$0xff]
    %v348 = vld [vmem:[#allocation2 + $0x90] sm:$0xff]
    %v349 = vld [vmem:[#allocation2 + $0x98] sm:$0xff]
    %v350 = vld [vmem:[#allocation2 + $0xa0] sm:$0xff]
    %v351 = vld [vmem:[#allocation2 + $0xa8] sm:$0xff]
    %v352 = vld [vmem:[#allocation2 + $0xb0] sm:$0xff]
    %v353 = vld [vmem:[#allocation2 + $0xb8] sm:$0xff]
    %v354 = vld [vmem:[#allocation2 + $0xc0] sm:$0xff]
    %v355 = vld [vmem:[#allocation2 + $0xc8] sm:$0xff]
    %v356 = vld [vmem:[#allocation2 + $0xd0] sm:$0xff]
    %v357 = vld [vmem:[#allocation2 + $0xd8] sm:$0xff]
    %v358 = vld [vmem:[#allocation2 + $0xe0] sm:$0xff]
    %v359 = vld [vmem:[#allocation2 + $0xe8] sm:$0xff]
    %v360 = vld [vmem:[#allocation2 + $0xf0] sm:$0xff]
    %v361 = vld [vmem:[#allocation2 + $0xf8] sm:$0xff]
    %v362 = vld [vmem:[#allocation2 + $0x100] sm:$0xff]
    %v363 = vld [vmem:[#allocation2 + $0x108] sm:$0xff]
    %v364 = vld [vmem:[#allocation2 + $0x110] sm:$0xff]
    %v365 = vld [vmem:[#allocation2 + $0x118] sm:$0xff]
    %v366 = vld [vmem:[#allocation2 + $0x120] sm:$0xff]
    %v367 = vld [vmem:[#allocation2 + $0x128] sm:$0xff]
    %v368 = vld [vmem:[#allocation2 + $0x130] sm:$0xff]
    %v369 = vld [vmem:[#allocation2 + $0x138] sm:$0xff]
    %v370 = vld [vmem:[#allocation2 + $0x140] sm:$0xff]
    %v371 = vld [vmem:[#allocation2 + $0x148] sm:$0xff]
    %v372 = vld [vmem:[#allocation2 + $0x150] sm:$0xff]
    %v373 = vld [vmem:[#allocation2 + $0x158] sm:$0xff]
    %v374 = vld [vmem:[#allocation2 + $0x160] sm:$0xff]
    %v375 = vld [vmem:[#allocation2 + $0x168] sm:$0xff]
    %v376 = vld [vmem:[#allocation2 + $0x170] sm:$0xff]
    %v377 = vld [vmem:[#allocation2 + $0x178] sm:$0xff]
    %v378 = vld [vmem:[#allocation2 + $0x180] sm:$0xff]
    %v379 = vld [vmem:[#allocation2 + $0x188] sm:$0xff]
    %v380 = vld [vmem:[#allocation2 + $0x190] sm:$0xff]
    %v381 = vld [vmem:[#allocation2 + $0x198] sm:$0xff]
    %v382 = vld [vmem:[#allocation2 + $0x1a0] sm:$0xff]
    %v383 = vld [vmem:[#allocation2 + $0x1a8] sm:$0xff]
    %v384 = vld [vmem:[#allocation2 + $0x1b0] sm:$0xff]
    %v385 = vld [vmem:[#allocation2 + $0x1b8] sm:$0xff]
    %v386 = vld [vmem:[#allocation2 + $0x1c0] sm:$0xff]
    %v387 = vld [vmem:[#allocation2 + $0x1c8] sm:$0xff]
    %v388 = vld [vmem:[#allocation2 + $0x1d0] sm:$0xff]
    %v389 = vld [vmem:[#allocation2 + $0x1d8] sm:$0xff]
    %v390 = vld [vmem:[#allocation2 + $0x1e0] sm:$0xff]
    %v391 = vld [vmem:[#allocation2 + $0x1e8] sm:$0xff]
    %v392 = vld [vmem:[#allocation2 + $0x1f0] sm:$0xff]
    %v393 = vld [vmem:[#allocation2 + $0x1f8] sm:$0xff]
    %v394 = vld [vmem:[#allocation2 + $0x200] sm:$0xff]
    %v395 = vld [vmem:[#allocation2 + $0x208] sm:$0xff]
    %v396 = vld [vmem:[#allocation2 + $0x210] sm:$0xff]
    %v397 = vld [vmem:[#allocation2 + $0x218] sm:$0xff]
    %v398 = vld [vmem:[#allocation2 + $0x220] sm:$0xff]
    %v399 = vld [vmem:[#allocation2 + $0x228] sm:$0xff]
    %v400 = vld [vmem:[#allocation2 + $0x230] sm:$0xff]
    %v401 = vld [vmem:[#allocation2 + $0x238] sm:$0xff]
    %v402 = vld [vmem:[#allocation2 + $0x240] sm:$0xff]
    %v403 = vld [vmem:[#allocation2 + $0x248] sm:$0xff]
    %v404 = vld [vmem:[#allocation2 + $0x250] sm:$0xff]
    %v405 = vld [vmem:[#allocation2 + $0x258] sm:$0xff]
    %v406 = vld [vmem:[#allocation2 + $0x260] sm:$0xff]
    %v407 = vld [vmem:[#allocation2 + $0x268] sm:$0xff]
    %v408 = vld [vmem:[#allocation2 + $0x270] sm:$0xff]
    %v409 = vld [vmem:[#allocation2 + $0x278] sm:$0xff]
    %v410 = vld [vmem:[#allocation2 + $0x280] sm:$0xff]
    %v411 = vld [vmem:[#allocation2 + $0x288] sm:$0xff]
    %v412 = vld [vmem:[#allocation2 + $0x290] sm:$0xff]
    %v413 = vld [vmem:[#allocation2 + $0x298] sm:$0xff]
    %v414 = vld [vmem:[#allocation2 + $0x2a0] sm:$0xff]
    %v415 = vld [vmem:[#allocation2 + $0x2a8] sm:$0xff]
    %v416 = vld [vmem:[#allocation2 + $0x2b0] sm:$0xff]
    %v417 = vld [vmem:[#allocation2 + $0x2b8] sm:$0xff]
    %v418 = vld [vmem:[#allocation2 + $0x2c0] sm:$0xff]
    %v419 = vld [vmem:[#allocation2 + $0x2c8] sm:$0xff]
    %v420 = vld [vmem:[#allocation2 + $0x2d0] sm:$0xff]
    %v421 = vld [vmem:[#allocation2 + $0x2d8] sm:$0xff]
    %v422 = vld [vmem:[#allocation2 + $0x2e0] sm:$0xff]
    %v423 = vld [vmem:[#allocation2 + $0x2e8] sm:$0xff]
    %v424 = vld [vmem:[#allocation2 + $0x2f0] sm:$0xff]
    %v425 = vld [vmem:[#allocation2 + $0x2f8] sm:$0xff]
    %v426 = vld [vmem:[#allocation2 + $0x300] sm:$0xff]
    %v427 = vld [vmem:[#allocation2 + $0x308] sm:$0xff]
    %v428 = vld [vmem:[#allocation2 + $0x310] sm:$0xff]
    %v429 = vld [vmem:[#allocation2 + $0x318] sm:$0xff]
    %v430 = vld [vmem:[#allocation2 + $0x320] sm:$0xff]
    %v431 = vld [vmem:[#allocation2 + $0x328] sm:$0xff]
    %v432 = vld [vmem:[#allocation2 + $0x330] sm:$0xff]
    %v433 = vld [vmem:[#allocation2 + $0x338] sm:$0xff]
    %v434 = vld [vmem:[#allocation2 + $0x340] sm:$0xff]
    %v435 = vld [vmem:[#allocation2 + $0x348] sm:$0xff]
    %v436 = vld [vmem:[#allocation2 + $0x350] sm:$0xff]
    %v437 = vld [vmem:[#allocation2 + $0x358] sm:$0xff]
    %v438 = vld [vmem:[#allocation2 + $0x360] sm:$0xff]
    %v439 = vld [vmem:[#allocation2 + $0x368] sm:$0xff]
    %v440 = vld [vmem:[#allocation2 + $0x370] sm:$0xff]
    %v441 = vld [vmem:[#allocation2 + $0x378] sm:$0xff]
    %v442 = vld [vmem:[#allocation2 + $0x380] sm:$0xff]
    %v443 = vld [vmem:[#allocation2 + $0x388] sm:$0xff]
    %v444 = vld [vmem:[#allocation2 + $0x390] sm:$0xff]
    %v445 = vld [vmem:[#allocation2 + $0x398] sm:$0xff]
    %v446 = vld [vmem:[#allocation2 + $0x3a0] sm:$0xff]
    %v447 = vld [vmem:[#allocation2 + $0x3a8] sm:$0xff]
    %v448 = vld [vmem:[#allocation2 + $0x3b0] sm:$0xff]
    %v449 = vld [vmem:[#allocation2 + $0x3b8] sm:$0xff]
    %v450 = vld [vmem:[#allocation2 + $0x3c0] sm:$0xff]
    %v451 = vld [vmem:[#allocation2 + $0x3c8] sm:$0xff]
    %v452 = vld [vmem:[#allocation2 + $0x3d0] sm:$0xff]
    %v453 = vld [vmem:[#allocation2 + $0x3d8] sm:$0xff]
    %v454 = vld [vmem:[#allocation2 + $0x3e0] sm:$0xff]
    %v455 = vld [vmem:[#allocation2 + $0x3e8] sm:$0xff]
    %v456 = vld [vmem:[#allocation2 + $0x3f0] sm:$0xff]
    %v457 = vld [vmem:[#allocation2 + $0x3f8] sm:$0xff]
    %v458 = vld [vmem:[#allocation2 + $0x400] sm:$0xff]
    %v459 = vld [vmem:[#allocation2 + $0x408] sm:$0xff]
    %v460 = vld [vmem:[#allocation2 + $0x410] sm:$0xff]
    %v461 = vld [vmem:[#allocation2 + $0x418] sm:$0xff]
    %v462 = vld [vmem:[#allocation2 + $0x420] sm:$0xff]
    %v463 = vld [vmem:[#allocation2 + $0x428] sm:$0xff]
    %v464 = vld [vmem:[#allocation2 + $0x430] sm:$0xff]
    %v465 = vld [vmem:[#allocation2 + $0x438] sm:$0xff]
    %v466 = vld [vmem:[#allocation2 + $0x440] sm:$0xff]
    %v467 = vld [vmem:[#allocation2 + $0x448] sm:$0xff]
    %v468 = vld [vmem:[#allocation2 + $0x450] sm:$0xff]
    %v469 = vld [vmem:[#allocation2 + $0x458] sm:$0xff]
    %v470 = vld [vmem:[#allocation2 + $0x460] sm:$0xff]
    %v471 = vld [vmem:[#allocation2 + $0x468] sm:$0xff]
    %v472 = vld [vmem:[#allocation2 + $0x470] sm:$0xff]
    %v473 = vld [vmem:[#allocation2 + $0x478] sm:$0xff]
    %v474 = vld [vmem:[#allocation2 + $0x480] sm:$0xff]
    %v475 = vld [vmem:[#allocation2 + $0x488] sm:$0xff]
    %v476 = vld [vmem:[#allocation2 + $0x490] sm:$0xff]
    %v477 = vld [vmem:[#allocation2 + $0x498] sm:$0xff]
    %v478 = vld [vmem:[#allocation2 + $0x4a0] sm:$0xff]
    %v479 = vld [vmem:[#allocation2 + $0x4a8] sm:$0xff]
    %v480 = vld [vmem:[#allocation2 + $0x4b0] sm:$0xff]
    %v481 = vld [vmem:[#allocation2 + $0x4b8] sm:$0xff]
    %v482 = vld [vmem:[#allocation2 + $0x4c0] sm:$0xff]
    %v483 = vld [vmem:[#allocation2 + $0x4c8] sm:$0xff]
    %v484 = vld [vmem:[#allocation2 + $0x4d0] sm:$0xff]
    %v485 = vld [vmem:[#allocation2 + $0x4d8] sm:$0xff]
    %v486 = vld [vmem:[#allocation2 + $0x4e0] sm:$0xff]
    %v487 = vld [vmem:[#allocation2 + $0x4e8] sm:$0xff]
    %v488 = vld [vmem:[#allocation2 + $0x4f0] sm:$0xff]
    %v489 = vld [vmem:[#allocation2 + $0x4f8] sm:$0xff]
    %v490 = vld [vmem:[#allocation2 + $0x500] sm:$0xff]
    %v491 = vld [vmem:[#allocation2 + $0x508] sm:$0xff]
    %v492 = vld [vmem:[#allocation2 + $0x510] sm:$0xff]
    %v493 = vld [vmem:[#allocation2 + $0x518] sm:$0xff]
    %v494 = vld [vmem:[#allocation2 + $0x520] sm:$0xff]
    %v495 = vld [vmem:[#allocation2 + $0x528] sm:$0xff]
    %v496 = vld [vmem:[#allocation2 + $0x530] sm:$0xff]
    %v497 = vld [vmem:[#allocation2 + $0x538] sm:$0xff]
    %v498 = vld [vmem:[#allocation2 + $0x540] sm:$0xff]
    %v499 = vld [vmem:[#allocation2 + $0x548] sm:$0xff]
    %v500 = vld [vmem:[#allocation2 + $0x550] sm:$0xff]
    %v501 = vld [vmem:[#allocation2 + $0x558] sm:$0xff]
    %v502 = vld [vmem:[#allocation2 + $0x560] sm:$0xff]
    %v503 = vld [vmem:[#allocation2 + $0x568] sm:$0xff]
    %v504 = vld [vmem:[#allocation2 + $0x570] sm:$0xff]
    %v505 = vld [vmem:[#allocation2 + $0x578] sm:$0xff]
    %v506 = vld [vmem:[#allocation2 + $0x580] sm:$0xff]
    %v507 = vld [vmem:[#allocation2 + $0x588] sm:$0xff]
    %v508 = vld [vmem:[#allocation2 + $0x590] sm:$0xff]
    %v509 = vld [vmem:[#allocation2 + $0x598] sm:$0xff]
    %v510 = vld [vmem:[#allocation2 + $0x5a0] sm:$0xff]
    %v511 = vld [vmem:[#allocation2 + $0x5a8] sm:$0xff]
    %v512 = vld [vmem:[#allocation2 + $0x5b0] sm:$0xff]
    %v513 = vld [vmem:[#allocation2 + $0x5b8] sm:$0xff]
    %v514 = vld [vmem:[#allocation2 + $0x5c0] sm:$0xff]
    %v515 = vld [vmem:[#allocation2 + $0x5c8] sm:$0xff]
    %v516 = vld [vmem:[#allocation2 + $0x5d0] sm:$0xff]
    %v517 = vld [vmem:[#allocation2 + $0x5d8] sm:$0xff]
    %v518 = vld [vmem:[#allocation2 + $0x5e0] sm:$0xff]
    %v519 = vld [vmem:[#allocation2 + $0x5e8] sm:$0xff]
    %v520 = vld [vmem:[#allocation2 + $0x5f0] sm:$0xff]
    %v521 = vld [vmem:[#allocation2 + $0x5f8] sm:$0xff]
    %v522 = vld [vmem:[#allocation2 + $0x600] sm:$0xff]
    %v523 = vld [vmem:[#allocation2 + $0x608] sm:$0xff]
    %v524 = vld [vmem:[#allocation2 + $0x610] sm:$0xff]
    %v525 = vld [vmem:[#allocation2 + $0x618] sm:$0xff]
    %v526 = vld [vmem:[#allocation2 + $0x620] sm:$0xff]
    %v527 = vld [vmem:[#allocation2 + $0x628] sm:$0xff]
    %v528 = vld [vmem:[#allocation2 + $0x630] sm:$0xff]
    %v529 = vld [vmem:[#allocation2 + $0x638] sm:$0xff]
    %v530 = vld [vmem:[%s6] sm:$0xf]
    %v532 = vperm.slane %v530, 0
    %v533 = vperm.slane %v530, 1
    %v534 = vperm.slane %v530, 2
    %v535 = vperm.slane %v530, 3
    %v740 = vunpack.c.l.b16 %v330
    %v741 = vunpack.c.h.b16 %v330
    %v742 = vunpack.c.l.b16 %v331
    %v743 = vunpack.c.h.b16 %v331
    %v744 = vunpack.c.l.b16 %v332
    %v745 = vunpack.c.h.b16 %v332
    %v746 = vunpack.c.l.b16 %v333
    %v747 = vunpack.c.h.b16 %v333
    %v748 = vunpack.c.l.b16 %v334
    %v749 = vunpack.c.h.b16 %v334
    %v750 = vunpack.c.l.b16 %v335
    %v751 = vunpack.c.h.b16 %v335
    %v752 = vunpack.c.l.b16 %v336
    %v753 = vunpack.c.h.b16 %v336
    %v754 = vunpack.c.l.b16 %v337
    %v755 = vunpack.c.h.b16 %v337
    %v756 = vunpack.c.l.b16 %v338
    %v757 = vunpack.c.h.b16 %v338
    %v758 = vunpack.c.l.b16 %v339
    %v759 = vunpack.c.h.b16 %v339
    %v760 = vunpack.c.l.b16 %v340
    %v761 = vunpack.c.h.b16 %v340
    %v762 = vunpack.c.l.b16 %v341
    %v763 = vunpack.c.h.b16 %v341
    %v764 = vunpack.c.l.b16 %v342
    %v765 = vunpack.c.h.b16 %v342
    %v766 = vunpack.c.l.b16 %v343
    %v767 = vunpack.c.h.b16 %v343
    %v768 = vunpack.c.l.b16 %v344
    %v769 = vunpack.c.h.b16 %v344
    %v770 = vunpack.c.l.b16 %v345
    %v771 = vunpack.c.h.b16 %v345
    %v772 = vunpack.c.l.b16 %v346
    %v773 = vunpack.c.h.b16 %v346
    %v774 = vunpack.c.l.b16 %v347
    %v775 = vunpack.c.h.b16 %v347
    %v776 = vunpack.c.l.b16 %v348
    %v777 = vunpack.c.h.b16 %v348
    %v778 = vunpack.c.l.b16 %v349
    %v779 = vunpack.c.h.b16 %v349
    %v780 = vunpack.c.l.b16 %v350
    %v781 = vunpack.c.h.b16 %v350
    %v782 = vunpack.c.l.b16 %v351
    %v783 = vunpack.c.h.b16 %v351
    %v784 = vunpack.c.l.b16 %v352
    %v785 = vunpack.c.h.b16 %v352
    %v786 = vunpack.c.l.b16 %v353
    %v787 = vunpack.c.h.b16 %v353
    %v788 = vunpack.c.l.b16 %v354
    %v789 = vunpack.c.h.b16 %v354
    %v790 = vunpack.c.l.b16 %v355
    %v791 = vunpack.c.h.b16 %v355
    %v792 = vunpack.c.l.b16 %v356
    %v793 = vunpack.c.h.b16 %v356
    %v794 = vunpack.c.l.b16 %v357
    %v795 = vunpack.c.h.b16 %v357
    %v796 = vunpack.c.l.b16 %v358
    %v797 = vunpack.c.h.b16 %v358
    %v798 = vunpack.c.l.b16 %v359
    %v799 = vunpack.c.h.b16 %v359
    %v800 = vunpack.c.l.b16 %v360
    %v801 = vunpack.c.h.b16 %v360
    %v802 = vunpack.c.l.b16 %v361
    %v803 = vunpack.c.h.b16 %v361
    %v804 = vunpack.c.l.b16 %v362
    %v805 = vunpack.c.h.b16 %v362
    %v806 = vunpack.c.l.b16 %v363
    %v807 = vunpack.c.h.b16 %v363
    %v808 = vunpack.c.l.b16 %v364
    %v809 = vunpack.c.h.b16 %v364
    %v810 = vunpack.c.l.b16 %v365
    %v811 = vunpack.c.h.b16 %v365
    %v812 = vunpack.c.l.b16 %v366
    %v813 = vunpack.c.h.b16 %v366
    %v814 = vunpack.c.l.b16 %v367
    %v815 = vunpack.c.h.b16 %v367
    %v816 = vunpack.c.l.b16 %v368
    %v817 = vunpack.c.h.b16 %v368
    %v818 = vunpack.c.l.b16 %v369
    %v819 = vunpack.c.h.b16 %v369
    %v820 = vunpack.c.l.b16 %v370
    %v821 = vunpack.c.h.b16 %v370
    %v822 = vunpack.c.l.b16 %v371
    %v823 = vunpack.c.h.b16 %v371
    %v824 = vunpack.c.l.b16 %v372
    %v825 = vunpack.c.h.b16 %v372
    %v826 = vunpack.c.l.b16 %v373
    %v827 = vunpack.c.h.b16 %v373
    %v828 = vunpack.c.l.b16 %v374
    %v829 = vunpack.c.h.b16 %v374
    %v830 = vunpack.c.l.b16 %v375
    %v831 = vunpack.c.h.b16 %v375
    %v832 = vunpack.c.l.b16 %v376
    %v833 = vunpack.c.h.b16 %v376
    %v834 = vunpack.c.l.b16 %v377
    %v835 = vunpack.c.h.b16 %v377
    %v836 = vunpack.c.l.b16 %v378
    %v837 = vunpack.c.h.b16 %v378
    %v838 = vunpack.c.l.b16 %v379
    %v839 = vunpack.c.h.b16 %v379
    %v840 = vunpack.c.l.b16 %v380
    %v841 = vunpack.c.h.b16 %v380
    %v842 = vunpack.c.l.b16 %v381
    %v843 = vunpack.c.h.b16 %v381
    %v844 = vunpack.c.l.b16 %v382
    %v845 = vunpack.c.h.b16 %v382
    %v846 = vunpack.c.l.b16 %v383
    %v847 = vunpack.c.h.b16 %v383
    %v848 = vunpack.c.l.b16 %v384
    %v849 = vunpack.c.h.b16 %v384
    %v850 = vunpack.c.l.b16 %v385
    %v851 = vunpack.c.h.b16 %v385
    %v852 = vunpack.c.l.b16 %v386
    %v853 = vunpack.c.h.b16 %v386
    %v854 = vunpack.c.l.b16 %v387
    %v855 = vunpack.c.h.b16 %v387
    %v856 = vunpack.c.l.b16 %v388
    %v857 = vunpack.c.h.b16 %v388
    %v858 = vunpack.c.l.b16 %v389
    %v859 = vunpack.c.h.b16 %v389
    %v860 = vunpack.c.l.b16 %v390
    %v861 = vunpack.c.h.b16 %v390
    %v862 = vunpack.c.l.b16 %v391
    %v863 = vunpack.c.h.b16 %v391
    %v864 = vunpack.c.l.b16 %v392
    %v865 = vunpack.c.h.b16 %v392
    %v866 = vunpack.c.l.b16 %v393
    %v867 = vunpack.c.h.b16 %v393
    %v868 = vunpack.c.l.b16 %v394
    %v869 = vunpack.c.h.b16 %v394
    %v870 = vunpack.c.l.b16 %v395
    %v871 = vunpack.c.h.b16 %v395
    %v872 = vunpack.c.l.b16 %v396
    %v873 = vunpack.c.h.b16 %v396
    %v874 = vunpack.c.l.b16 %v397
    %v875 = vunpack.c.h.b16 %v397
    %v876 = vunpack.c.l.b16 %v398
    %v877 = vunpack.c.h.b16 %v398
    %v878 = vunpack.c.l.b16 %v399
    %v879 = vunpack.c.h.b16 %v399
    %v880 = vunpack.c.l.b16 %v400
    %v881 = vunpack.c.h.b16 %v400
    %v882 = vunpack.c.l.b16 %v401
    %v883 = vunpack.c.h.b16 %v401
    %v884 = vunpack.c.l.b16 %v402
    %v885 = vunpack.c.h.b16 %v402
    %v886 = vunpack.c.l.b16 %v403
    %v887 = vunpack.c.h.b16 %v403
    %v888 = vunpack.c.l.b16 %v404
    %v889 = vunpack.c.h.b16 %v404
    %v890 = vunpack.c.l.b16 %v405
    %v891 = vunpack.c.h.b16 %v405
    %v892 = vunpack.c.l.b16 %v406
    %v893 = vunpack.c.h.b16 %v406
    %v894 = vunpack.c.l.b16 %v407
    %v895 = vunpack.c.h.b16 %v407
    %v896 = vunpack.c.l.b16 %v408
    %v897 = vunpack.c.h.b16 %v408
    %v898 = vunpack.c.l.b16 %v409
    %v899 = vunpack.c.h.b16 %v409
    %v900 = vunpack.c.l.b16 %v410
    %v901 = vunpack.c.h.b16 %v410
    %v902 = vunpack.c.l.b16 %v411
    %v903 = vunpack.c.h.b16 %v411
    %v904 = vunpack.c.l.b16 %v412
    %v905 = vunpack.c.h.b16 %v412
    %v906 = vunpack.c.l.b16 %v413
    %v907 = vunpack.c.h.b16 %v413
    %v908 = vunpack.c.l.b16 %v414
    %v909 = vunpack.c.h.b16 %v414
    %v910 = vunpack.c.l.b16 %v415
    %v911 = vunpack.c.h.b16 %v415
    %v912 = vunpack.c.l.b16 %v416
    %v913 = vunpack.c.h.b16 %v416
    %v914 = vunpack.c.l.b16 %v417
    %v915 = vunpack.c.h.b16 %v417
    %v916 = vunpack.c.l.b16 %v418
    %v917 = vunpack.c.h.b16 %v418
    %v918 = vunpack.c.l.b16 %v419
    %v919 = vunpack.c.h.b16 %v419
    %v920 = vunpack.c.l.b16 %v420
    %v921 = vunpack.c.h.b16 %v420
    %v922 = vunpack.c.l.b16 %v421
    %v923 = vunpack.c.h.b16 %v421
    %v924 = vunpack.c.l.b16 %v422
    %v925 = vunpack.c.h.b16 %v422
    %v926 = vunpack.c.l.b16 %v423
    %v927 = vunpack.c.h.b16 %v423
    %v928 = vunpack.c.l.b16 %v424
    %v929 = vunpack.c.h.b16 %v424
    %v930 = vunpack.c.l.b16 %v425
    %v931 = vunpack.c.h.b16 %v425
    %v932 = vunpack.c.l.b16 %v426
    %v933 = vunpack.c.h.b16 %v426
    %v934 = vunpack.c.l.b16 %v427
    %v935 = vunpack.c.h.b16 %v427
    %v936 = vunpack.c.l.b16 %v428
    %v937 = vunpack.c.h.b16 %v428
    %v938 = vunpack.c.l.b16 %v429
    %v939 = vunpack.c.h.b16 %v429
    %v940 = vunpack.c.l.b16 %v430
    %v941 = vunpack.c.h.b16 %v430
    %v942 = vunpack.c.l.b16 %v431
    %v943 = vunpack.c.h.b16 %v431
    %v944 = vunpack.c.l.b16 %v432
    %v945 = vunpack.c.h.b16 %v432
    %v946 = vunpack.c.l.b16 %v433
    %v947 = vunpack.c.h.b16 %v433
    %v948 = vunpack.c.l.b16 %v434
    %v949 = vunpack.c.h.b16 %v434
    %v950 = vunpack.c.l.b16 %v435
    %v951 = vunpack.c.h.b16 %v435
    %v952 = vunpack.c.l.b16 %v436
    %v953 = vunpack.c.h.b16 %v436
    %v954 = vunpack.c.l.b16 %v437
    %v955 = vunpack.c.h.b16 %v437
    %v956 = vunpack.c.l.b16 %v438
    %v957 = vunpack.c.h.b16 %v438
    %v958 = vunpack.c.l.b16 %v439
    %v959 = vunpack.c.h.b16 %v439
    %v960 = vunpack.c.l.b16 %v440
    %v961 = vunpack.c.h.b16 %v440
    %v962 = vunpack.c.l.b16 %v441
    %v963 = vunpack.c.h.b16 %v441
    %v964 = vunpack.c.l.b16 %v442
    %v965 = vunpack.c.h.b16 %v442
    %v966 = vunpack.c.l.b16 %v443
    %v967 = vunpack.c.h.b16 %v443
    %v968 = vunpack.c.l.b16 %v444
    %v969 = vunpack.c.h.b16 %v444
    %v970 = vunpack.c.l.b16 %v445
    %v971 = vunpack.c.h.b16 %v445
    %v972 = vunpack.c.l.b16 %v446
    %v973 = vunpack.c.h.b16 %v446
    %v974 = vunpack.c.l.b16 %v447
    %v975 = vunpack.c.h.b16 %v447
    %v976 = vunpack.c.l.b16 %v448
    %v977 = vunpack.c.h.b16 %v448
    %v978 = vunpack.c.l.b16 %v449
    %v979 = vunpack.c.h.b16 %v449
    %v980 = vunpack.c.l.b16 %v450
    %v981 = vunpack.c.h.b16 %v450
    %v982 = vunpack.c.l.b16 %v451
    %v983 = vunpack.c.h.b16 %v451
    %v984 = vunpack.c.l.b16 %v452
    %v985 = vunpack.c.h.b16 %v452
    %v986 = vunpack.c.l.b16 %v453
    %v987 = vunpack.c.h.b16 %v453
    %v988 = vunpack.c.l.b16 %v454
    %v989 = vunpack.c.h.b16 %v454
    %v990 = vunpack.c.l.b16 %v455
    %v991 = vunpack.c.h.b16 %v455
    %v992 = vunpack.c.l.b16 %v456
    %v993 = vunpack.c.h.b16 %v456
    %v994 = vunpack.c.l.b16 %v457
    %v995 = vunpack.c.h.b16 %v457
    %v996 = vunpack.c.l.b16 %v458
    %v997 = vunpack.c.h.b16 %v458
    %v998 = vunpack.c.l.b16 %v459
    %v999 = vunpack.c.h.b16 %v459
    %v1000 = vunpack.c.l.b16 %v460
    %v1001 = vunpack.c.h.b16 %v460
    %v1002 = vunpack.c.l.b16 %v461
    %v1003 = vunpack.c.h.b16 %v461
    %v1004 = vunpack.c.l.b16 %v462
    %v1005 = vunpack.c.h.b16 %v462
    %v1006 = vunpack.c.l.b16 %v463
    %v1007 = vunpack.c.h.b16 %v463
    %v1008 = vunpack.c.l.b16 %v464
    %v1009 = vunpack.c.h.b16 %v464
    %v1010 = vunpack.c.l.b16 %v465
    %v1011 = vunpack.c.h.b16 %v465
    %v1012 = vunpack.c.l.b16 %v466
    %v1013 = vunpack.c.h.b16 %v466
    %v1014 = vunpack.c.l.b16 %v467
    %v1015 = vunpack.c.h.b16 %v467
    %v1016 = vunpack.c.l.b16 %v468
    %v1017 = vunpack.c.h.b16 %v468
    %v1018 = vunpack.c.l.b16 %v469
    %v1019 = vunpack.c.h.b16 %v469
    %v1020 = vunpack.c.l.b16 %v470
    %v1021 = vunpack.c.h.b16 %v470
    %v1022 = vunpack.c.l.b16 %v471
    %v1023 = vunpack.c.h.b16 %v471
    %v1024 = vunpack.c.l.b16 %v472
    %v1025 = vunpack.c.h.b16 %v472
    %v1026 = vunpack.c.l.b16 %v473
    %v1027 = vunpack.c.h.b16 %v473
    %v1028 = vunpack.c.l.b16 %v474
    %v1029 = vunpack.c.h.b16 %v474
    %v1030 = vunpack.c.l.b16 %v475
    %v1031 = vunpack.c.h.b16 %v475
    %v1032 = vunpack.c.l.b16 %v476
    %v1033 = vunpack.c.h.b16 %v476
    %v1034 = vunpack.c.l.b16 %v477
    %v1035 = vunpack.c.h.b16 %v477
    %v1036 = vunpack.c.l.b16 %v478
    %v1037 = vunpack.c.h.b16 %v478
    %v1038 = vunpack.c.l.b16 %v479
    %v1039 = vunpack.c.h.b16 %v479
    %v1040 = vunpack.c.l.b16 %v480
    %v1041 = vunpack.c.h.b16 %v480
    %v1042 = vunpack.c.l.b16 %v481
    %v1043 = vunpack.c.h.b16 %v481
    %v1044 = vunpack.c.l.b16 %v482
    %v1045 = vunpack.c.h.b16 %v482
    %v1046 = vunpack.c.l.b16 %v483
    %v1047 = vunpack.c.h.b16 %v483
    %v1048 = vunpack.c.l.b16 %v484
    %v1049 = vunpack.c.h.b16 %v484
    %v1050 = vunpack.c.l.b16 %v485
    %v1051 = vunpack.c.h.b16 %v485
    %v1052 = vunpack.c.l.b16 %v486
    %v1053 = vunpack.c.h.b16 %v486
    %v1054 = vunpack.c.l.b16 %v487
    %v1055 = vunpack.c.h.b16 %v487
    %v1056 = vunpack.c.l.b16 %v488
    %v1057 = vunpack.c.h.b16 %v488
    %v1058 = vunpack.c.l.b16 %v489
    %v1059 = vunpack.c.h.b16 %v489
    %v1060 = vunpack.c.l.b16 %v490
    %v1061 = vunpack.c.h.b16 %v490
    %v1062 = vunpack.c.l.b16 %v491
    %v1063 = vunpack.c.h.b16 %v491
    %v1064 = vunpack.c.l.b16 %v492
    %v1065 = vunpack.c.h.b16 %v492
    %v1066 = vunpack.c.l.b16 %v493
    %v1067 = vunpack.c.h.b16 %v493
    %v1068 = vunpack.c.l.b16 %v494
    %v1069 = vunpack.c.h.b16 %v494
    %v1070 = vunpack.c.l.b16 %v495
    %v1071 = vunpack.c.h.b16 %v495
    %v1072 = vunpack.c.l.b16 %v496
    %v1073 = vunpack.c.h.b16 %v496
    %v1074 = vunpack.c.l.b16 %v497
    %v1075 = vunpack.c.h.b16 %v497
    %v1076 = vunpack.c.l.b16 %v498
    %v1077 = vunpack.c.h.b16 %v498
    %v1078 = vunpack.c.l.b16 %v499
    %v1079 = vunpack.c.h.b16 %v499
    %v1080 = vunpack.c.l.b16 %v500
    %v1081 = vunpack.c.h.b16 %v500
    %v1082 = vunpack.c.l.b16 %v501
    %v1083 = vunpack.c.h.b16 %v501
    %v1084 = vunpack.c.l.b16 %v502
    %v1085 = vunpack.c.h.b16 %v502
    %v1086 = vunpack.c.l.b16 %v503
    %v1087 = vunpack.c.h.b16 %v503
    %v1088 = vunpack.c.l.b16 %v504
    %v1089 = vunpack.c.h.b16 %v504
    %v1090 = vunpack.c.l.b16 %v505
    %v1091 = vunpack.c.h.b16 %v505
    %v1092 = vunpack.c.l.b16 %v506
    %v1093 = vunpack.c.h.b16 %v506
    %v1094 = vunpack.c.l.b16 %v507
    %v1095 = vunpack.c.h.b16 %v507
    %v1096 = vunpack.c.l.b16 %v508
    %v1097 = vunpack.c.h.b16 %v508
    %v1098 = vunpack.c.l.b16 %v509
    %v1099 = vunpack.c.h.b16 %v509
    %v1100 = vunpack.c.l.b16 %v510
    %v1101 = vunpack.c.h.b16 %v510
    %v1102 = vunpack.c.l.b16 %v511
    %v1103 = vunpack.c.h.b16 %v511
    %v1104 = vunpack.c.l.b16 %v512
    %v1105 = vunpack.c.h.b16 %v512
    %v1106 = vunpack.c.l.b16 %v513
    %v1107 = vunpack.c.h.b16 %v513
    %v1108 = vunpack.c.l.b16 %v514
    %v1109 = vunpack.c.h.b16 %v514
    %v1110 = vunpack.c.l.b16 %v515
    %v1111 = vunpack.c.h.b16 %v515
    %v1112 = vunpack.c.l.b16 %v516
    %v1113 = vunpack.c.h.b16 %v516
    %v1114 = vunpack.c.l.b16 %v517
    %v1115 = vunpack.c.h.b16 %v517
    %v1116 = vunpack.c.l.b16 %v518
    %v1117 = vunpack.c.h.b16 %v518
    %v1118 = vunpack.c.l.b16 %v519
    %v1119 = vunpack.c.h.b16 %v519
    %v1120 = vunpack.c.l.b16 %v520
    %v1121 = vunpack.c.h.b16 %v520
    %v1122 = vunpack.c.l.b16 %v521
    %v1123 = vunpack.c.h.b16 %v521
    %v1124 = vunpack.c.l.b16 %v522
    %v1125 = vunpack.c.h.b16 %v522
    %v1126 = vunpack.c.l.b16 %v523
    %v1127 = vunpack.c.h.b16 %v523
    %v1128 = vunpack.c.l.b16 %v524
    %v1129 = vunpack.c.h.b16 %v524
    %v1130 = vunpack.c.l.b16 %v525
    %v1131 = vunpack.c.h.b16 %v525
    %v1132 = vunpack.c.l.b16 %v526
    %v1133 = vunpack.c.h.b16 %v526
    %v1134 = vunpack.c.l.b16 %v527
    %v1135 = vunpack.c.h.b16 %v527
    %v1136 = vunpack.c.l.b16 %v528
    %v1137 = vunpack.c.h.b16 %v528
    %v1138 = vunpack.c.l.b16 %v529
    %v1139 = vunpack.c.h.b16 %v529
    %v1140 = vpack.c.b16 %v744, %v740
    %v1141 = vpack.c.b16 %v745, %v741
    %v1142 = vpack.c.b16 %v746, %v742
    %v1143 = vpack.c.b16 %v747, %v743
    %v1144 = vpack.c.b16 %v752, %v748
    %v1145 = vpack.c.b16 %v753, %v749
    %v1146 = vpack.c.b16 %v754, %v750
    %v1147 = vpack.c.b16 %v755, %v751
    %v1148 = vpack.c.b16 %v760, %v756
    %v1149 = vpack.c.b16 %v761, %v757
    %v1150 = vpack.c.b16 %v762, %v758
    %v1151 = vpack.c.b16 %v763, %v759
    %v1152 = vpack.c.b16 %v768, %v764
    %v1153 = vpack.c.b16 %v769, %v765
    %v1154 = vpack.c.b16 %v770, %v766
    %v1155 = vpack.c.b16 %v771, %v767
    %v1156 = vpack.c.b16 %v776, %v772
    %v1157 = vpack.c.b16 %v777, %v773
    %v1158 = vpack.c.b16 %v778, %v774
    %v1159 = vpack.c.b16 %v779, %v775
    %v1160 = vpack.c.b16 %v784, %v780
    %v1161 = vpack.c.b16 %v785, %v781
    %v1162 = vpack.c.b16 %v786, %v782
    %v1163 = vpack.c.b16 %v787, %v783
    %v1164 = vpack.c.b16 %v792, %v788
    %v1165 = vpack.c.b16 %v793, %v789
    %v1166 = vpack.c.b16 %v794, %v790
    %v1167 = vpack.c.b16 %v795, %v791
    %v1168 = vpack.c.b16 %v800, %v796
    %v1169 = vpack.c.b16 %v801, %v797
    %v1170 = vpack.c.b16 %v802, %v798
    %v1171 = vpack.c.b16 %v803, %v799
    %v1172 = vpack.c.b16 %v808, %v804
    %v1173 = vpack.c.b16 %v809, %v805
    %v1174 = vpack.c.b16 %v810, %v806
    %v1175 = vpack.c.b16 %v811, %v807
    %v1176 = vpack.c.b16 %v816, %v812
    %v1177 = vpack.c.b16 %v817, %v813
    %v1178 = vpack.c.b16 %v818, %v814
    %v1179 = vpack.c.b16 %v819, %v815
    %v1180 = vpack.c.b16 %v824, %v820
    %v1181 = vpack.c.b16 %v825, %v821
    %v1182 = vpack.c.b16 %v826, %v822
    %v1183 = vpack.c.b16 %v827, %v823
    %v1184 = vpack.c.b16 %v832, %v828
    %v1185 = vpack.c.b16 %v833, %v829
    %v1186 = vpack.c.b16 %v834, %v830
    %v1187 = vpack.c.b16 %v835, %v831
    %v1188 = vpack.c.b16 %v840, %v836
    %v1189 = vpack.c.b16 %v841, %v837
    %v1190 = vpack.c.b16 %v842, %v838
    %v1191 = vpack.c.b16 %v843, %v839
    %v1192 = vpack.c.b16 %v848, %v844
    %v1193 = vpack.c.b16 %v849, %v845
    %v1194 = vpack.c.b16 %v850, %v846
    %v1195 = vpack.c.b16 %v851, %v847
    %v1196 = vpack.c.b16 %v856, %v852
    %v1197 = vpack.c.b16 %v857, %v853
    %v1198 = vpack.c.b16 %v858, %v854
    %v1199 = vpack.c.b16 %v859, %v855
    %v1200 = vpack.c.b16 %v864, %v860
    %v1201 = vpack.c.b16 %v865, %v861
    %v1202 = vpack.c.b16 %v866, %v862
    %v1203 = vpack.c.b16 %v867, %v863
    %v1204 = vpack.c.b16 %v872, %v868
    %v1205 = vpack.c.b16 %v873, %v869
    %v1206 = vpack.c.b16 %v874, %v870
    %v1207 = vpack.c.b16 %v875, %v871
    %v1208 = vpack.c.b16 %v880, %v876
    %v1209 = vpack.c.b16 %v881, %v877
    %v1210 = vpack.c.b16 %v882, %v878
    %v1211 = vpack.c.b16 %v883, %v879
    %v1212 = vpack.c.b16 %v888, %v884
    %v1213 = vpack.c.b16 %v889, %v885
    %v1214 = vpack.c.b16 %v890, %v886
    %v1215 = vpack.c.b16 %v891, %v887
    %v1216 = vpack.c.b16 %v896, %v892
    %v1217 = vpack.c.b16 %v897, %v893
    %v1218 = vpack.c.b16 %v898, %v894
    %v1219 = vpack.c.b16 %v899, %v895
    %v1220 = vpack.c.b16 %v904, %v900
    %v1221 = vpack.c.b16 %v905, %v901
    %v1222 = vpack.c.b16 %v906, %v902
    %v1223 = vpack.c.b16 %v907, %v903
    %v1224 = vpack.c.b16 %v912, %v908
    %v1225 = vpack.c.b16 %v913, %v909
    %v1226 = vpack.c.b16 %v914, %v910
    %v1227 = vpack.c.b16 %v915, %v911
    %v1228 = vpack.c.b16 %v920, %v916
    %v1229 = vpack.c.b16 %v921, %v917
    %v1230 = vpack.c.b16 %v922, %v918
    %v1231 = vpack.c.b16 %v923, %v919
    %v1232 = vpack.c.b16 %v928, %v924
    %v1233 = vpack.c.b16 %v929, %v925
    %v1234 = vpack.c.b16 %v930, %v926
    %v1235 = vpack.c.b16 %v931, %v927
    %v1236 = vpack.c.b16 %v936, %v932
    %v1237 = vpack.c.b16 %v937, %v933
    %v1238 = vpack.c.b16 %v938, %v934
    %v1239 = vpack.c.b16 %v939, %v935
    %v1240 = vpack.c.b16 %v944, %v940
    %v1241 = vpack.c.b16 %v945, %v941
    %v1242 = vpack.c.b16 %v946, %v942
    %v1243 = vpack.c.b16 %v947, %v943
    %v1244 = vpack.c.b16 %v952, %v948
    %v1245 = vpack.c.b16 %v953, %v949
    %v1246 = vpack.c.b16 %v954, %v950
    %v1247 = vpack.c.b16 %v955, %v951
    %v1248 = vpack.c.b16 %v960, %v956
    %v1249 = vpack.c.b16 %v961, %v957
    %v1250 = vpack.c.b16 %v962, %v958
    %v1251 = vpack.c.b16 %v963, %v959
    %v1252 = vpack.c.b16 %v968, %v964
    %v1253 = vpack.c.b16 %v969, %v965
    %v1254 = vpack.c.b16 %v970, %v966
    %v1255 = vpack.c.b16 %v971, %v967
    %v1256 = vpack.c.b16 %v976, %v972
    %v1257 = vpack.c.b16 %v977, %v973
    %v1258 = vpack.c.b16 %v978, %v974
    %v1259 = vpack.c.b16 %v979, %v975
    %v1260 = vpack.c.b16 %v984, %v980
    %v1261 = vpack.c.b16 %v985, %v981
    %v1262 = vpack.c.b16 %v986, %v982
    %v1263 = vpack.c.b16 %v987, %v983
    %v1264 = vpack.c.b16 %v992, %v988
    %v1265 = vpack.c.b16 %v993, %v989
    %v1266 = vpack.c.b16 %v994, %v990
    %v1267 = vpack.c.b16 %v995, %v991
    %v1268 = vpack.c.b16 %v1000, %v996
    %v1269 = vpack.c.b16 %v1001, %v997
    %v1270 = vpack.c.b16 %v1002, %v998
    %v1271 = vpack.c.b16 %v1003, %v999
    %v1272 = vpack.c.b16 %v1008, %v1004
    %v1273 = vpack.c.b16 %v1009, %v1005
    %v1274 = vpack.c.b16 %v1010, %v1006
    %v1275 = vpack.c.b16 %v1011, %v1007
    %v1276 = vpack.c.b16 %v1016, %v1012
    %v1277 = vpack.c.b16 %v1017, %v1013
    %v1278 = vpack.c.b16 %v1018, %v1014
    %v1279 = vpack.c.b16 %v1019, %v1015
    %v1280 = vpack.c.b16 %v1024, %v1020
    %v1281 = vpack.c.b16 %v1025, %v1021
    %v1282 = vpack.c.b16 %v1026, %v1022
    %v1283 = vpack.c.b16 %v1027, %v1023
    %v1284 = vpack.c.b16 %v1032, %v1028
    %v1285 = vpack.c.b16 %v1033, %v1029
    %v1286 = vpack.c.b16 %v1034, %v1030
    %v1287 = vpack.c.b16 %v1035, %v1031
    %v1288 = vpack.c.b16 %v1040, %v1036
    %v1289 = vpack.c.b16 %v1041, %v1037
    %v1290 = vpack.c.b16 %v1042, %v1038
    %v1291 = vpack.c.b16 %v1043, %v1039
    %v1292 = vpack.c.b16 %v1048, %v1044
    %v1293 = vpack.c.b16 %v1049, %v1045
    %v1294 = vpack.c.b16 %v1050, %v1046
    %v1295 = vpack.c.b16 %v1051, %v1047
    %v1296 = vpack.c.b16 %v1056, %v1052
    %v1297 = vpack.c.b16 %v1057, %v1053
    %v1298 = vpack.c.b16 %v1058, %v1054
    %v1299 = vpack.c.b16 %v1059, %v1055
    %v1300 = vpack.c.b16 %v1064, %v1060
    %v1301 = vpack.c.b16 %v1065, %v1061
    %v1302 = vpack.c.b16 %v1066, %v1062
    %v1303 = vpack.c.b16 %v1067, %v1063
    %v1304 = vpack.c.b16 %v1072, %v1068
    %v1305 = vpack.c.b16 %v1073, %v1069
    %v1306 = vpack.c.b16 %v1074, %v1070
    %v1307 = vpack.c.b16 %v1075, %v1071
    %v1308 = vpack.c.b16 %v1080, %v1076
    %v1309 = vpack.c.b16 %v1081, %v1077
    %v1310 = vpack.c.b16 %v1082, %v1078
    %v1311 = vpack.c.b16 %v1083, %v1079
    %v1312 = vpack.c.b16 %v1088, %v1084
    %v1313 = vpack.c.b16 %v1089, %v1085
    %v1314 = vpack.c.b16 %v1090, %v1086
    %v1315 = vpack.c.b16 %v1091, %v1087
    %v1316 = vpack.c.b16 %v1096, %v1092
    %v1317 = vpack.c.b16 %v1097, %v1093
    %v1318 = vpack.c.b16 %v1098, %v1094
    %v1319 = vpack.c.b16 %v1099, %v1095
    %v1320 = vpack.c.b16 %v1104, %v1100
    %v1321 = vpack.c.b16 %v1105, %v1101
    %v1322 = vpack.c.b16 %v1106, %v1102
    %v1323 = vpack.c.b16 %v1107, %v1103
    %v1324 = vpack.c.b16 %v1112, %v1108
    %v1325 = vpack.c.b16 %v1113, %v1109
    %v1326 = vpack.c.b16 %v1114, %v1110
    %v1327 = vpack.c.b16 %v1115, %v1111
    %v1328 = vpack.c.b16 %v1120, %v1116
    %v1329 = vpack.c.b16 %v1121, %v1117
    %v1330 = vpack.c.b16 %v1122, %v1118
    %v1331 = vpack.c.b16 %v1123, %v1119
    %v1332 = vpack.c.b16 %v1128, %v1124
    %v1333 = vpack.c.b16 %v1129, %v1125
    %v1334 = vpack.c.b16 %v1130, %v1126
    %v1335 = vpack.c.b16 %v1131, %v1127
    %v1336 = vpack.c.b16 %v1136, %v1132
    %v1337 = vpack.c.b16 %v1137, %v1133
    %v1338 = vpack.c.b16 %v1138, %v1134
    %v1339 = vpack.c.b16 %v1139, %v1135
    %v1541 = vsel %vm83, %v329, 0
    %1543 = vmatpush.bf16.msra.mxu0 %v1168
    %1544 = vmatpush.bf16.msra.mxu0 %v1164
    %1545 = vmatpush.bf16.msra.mxu0 %v1160
    %1546 = vmatpush.bf16.msra.mxu0 %v1156
    %1547 = vmatpush.bf16.msra.mxu0 %v1152
    %1548 = vmatpush.bf16.msra.mxu0 %v1148
    %1549 = vmatpush.bf16.msra.mxu0 %v1144
    %1550 = vmatpush.bf16.msra.mxu0 %v1140
    %1551 = vmatmul.bf16.gmra.mxu0 %v323
    %v1552 = vpop.f32.mrf.mxu0
    %v1553 = vadd.f32 %v532, %v1552
    %v1554 = vpop.f32.mrf.mxu0
    %v1555 = vadd.f32 %v532, %v1554
    %1556 = vdwg.mxu0
    %1557 = vmatpush.bf16.msra.mxu0 %v1200
    %1558 = vmatpush.bf16.msra.mxu0 %v1196
    %1559 = vmatpush.bf16.msra.mxu0 %v1192
    %1560 = vmatpush.bf16.msra.mxu0 %v1188
    %1561 = vmatpush.bf16.msra.mxu0 %v1184
    %1562 = vmatpush.bf16.msra.mxu0 %v1180
    %1563 = vmatpush.bf16.msra.mxu0 %v1176
    %1564 = vmatpush.bf16.msra.mxu0 %v1172
    %1565 = vmatmul.bf16.gmra.mxu0 %v324
    %v1566 = vpop.f32.mrf.mxu0
    %v1567 = vadd.f32 %v1553, %v1566
    %v1568 = vpop.f32.mrf.mxu0
    %v1569 = vadd.f32 %v1555, %v1568
    %1570 = vdwg.mxu0
    %1571 = vmatpush.bf16.msra.mxu0 %v1232
    %1572 = vmatpush.bf16.msra.mxu0 %v1228
    %1573 = vmatpush.bf16.msra.mxu0 %v1224
    %1574 = vmatpush.bf16.msra.mxu0 %v1220
    %1575 = vmatpush.bf16.msra.mxu0 %v1216
    %1576 = vmatpush.bf16.msra.mxu0 %v1212
    %1577 = vmatpush.bf16.msra.mxu0 %v1208
    %1578 = vmatpush.bf16.msra.mxu0 %v1204
    %1579 = vmatmul.bf16.gmra.mxu0 %v325
    %v1580 = vpop.f32.mrf.mxu0
    %v1581 = vadd.f32 %v1567, %v1580
    %v1582 = vpop.f32.mrf.mxu0
    %v1583 = vadd.f32 %v1569, %v1582
    %1584 = vdwg.mxu0
    %1585 = vmatpush.bf16.msra.mxu0 %v1264
    %1586 = vmatpush.bf16.msra.mxu0 %v1260
    %1587 = vmatpush.bf16.msra.mxu0 %v1256
    %1588 = vmatpush.bf16.msra.mxu0 %v1252
    %1589 = vmatpush.bf16.msra.mxu0 %v1248
    %1590 = vmatpush.bf16.msra.mxu0 %v1244
    %1591 = vmatpush.bf16.msra.mxu0 %v1240
    %1592 = vmatpush.bf16.msra.mxu0 %v1236
    %1593 = vmatmul.bf16.gmra.mxu0 %v326
    %v1594 = vpop.f32.mrf.mxu0
    %v1595 = vadd.f32 %v1581, %v1594
    %v1596 = vpop.f32.mrf.mxu0
    %v1597 = vadd.f32 %v1583, %v1596
    %1598 = vdwg.mxu0
    %1599 = vmatpush.bf16.msra.mxu0 %v1296
    %1600 = vmatpush.bf16.msra.mxu0 %v1292
    %1601 = vmatpush.bf16.msra.mxu0 %v1288
    %1602 = vmatpush.bf16.msra.mxu0 %v1284
    %1603 = vmatpush.bf16.msra.mxu0 %v1280
    %1604 = vmatpush.bf16.msra.mxu0 %v1276
    %1605 = vmatpush.bf16.msra.mxu0 %v1272
    %1606 = vmatpush.bf16.msra.mxu0 %v1268
    %1607 = vmatmul.bf16.gmra.mxu0 %v327
    %v1608 = vpop.f32.mrf.mxu0
    %v1609 = vadd.f32 %v1595, %v1608
    %v1610 = vpop.f32.mrf.mxu0
    %v1611 = vadd.f32 %v1597, %v1610
    %1612 = vdwg.mxu0
    %1613 = vmatpush.bf16.msra.mxu0 %v1328
    %1614 = vmatpush.bf16.msra.mxu0 %v1324
    %1615 = vmatpush.bf16.msra.mxu0 %v1320
    %1616 = vmatpush.bf16.msra.mxu0 %v1316
    %1617 = vmatpush.bf16.msra.mxu0 %v1312
    %1618 = vmatpush.bf16.msra.mxu0 %v1308
    %1619 = vmatpush.bf16.msra.mxu0 %v1304
    %1620 = vmatpush.bf16.msra.mxu0 %v1300
    %1621 = vmatmul.bf16.gmra.mxu0 %v328
    %v1622 = vpop.f32.mrf.mxu0
    %v1623 = vadd.f32 %v1609, %v1622
    %v1624 = vpop.f32.mrf.mxu0
    %v1625 = vadd.f32 %v1611, %v1624
    %1626 = vdwg.mxu0
    %1627 = vmatpush.bf16.msra.mxu0 0
    %1628 = vmatpush.bf16.msra.mxu0 0
    %1629 = vmatpush.bf16.msra.mxu0 0
    %1630 = vmatpush.bf16.msra.mxu0 0
    %1631 = vmatpush.bf16.msra.mxu0 0
    %1632 = vmatpush.bf16.msra.mxu0 0
    %1633 = vmatpush.bf16.msra.mxu0 %v1336
    %1634 = vmatpush.bf16.msra.mxu0 %v1332
    %1635 = vmatmul.bf16.gmra.mxu0 %v1541
    %v1636 = vpop.f32.mrf.mxu0
    %v1637 = vadd.f32 %v1623, %v1636
    %v1638 = vpop.f32.mrf.mxu0
    %v1639 = vadd.f32 %v1625, %v1638
    %1640 = vdwg.mxu0
    %1641 = vmatpush.bf16.msra.mxu0 %v1169
    %1642 = vmatpush.bf16.msra.mxu0 %v1165
    %1643 = vmatpush.bf16.msra.mxu0 %v1161
    %1644 = vmatpush.bf16.msra.mxu0 %v1157
    %1645 = vmatpush.bf16.msra.mxu0 %v1153
    %1646 = vmatpush.bf16.msra.mxu0 %v1149
    %1647 = vmatpush.bf16.msra.mxu0 %v1145
    %1648 = vmatpush.bf16.msra.mxu0 %v1141
    %1649 = vmatmul.bf16.gmra.mxu0 %v323
    %v1650 = vpop.f32.mrf.mxu0
    %v1651 = vadd.f32 %v533, %v1650
    %v1652 = vpop.f32.mrf.mxu0
    %v1653 = vadd.f32 %v533, %v1652
    %1654 = vdwg.mxu0
    %1655 = vmatpush.bf16.msra.mxu0 %v1201
    %1656 = vmatpush.bf16.msra.mxu0 %v1197
    %1657 = vmatpush.bf16.msra.mxu0 %v1193
    %1658 = vmatpush.bf16.msra.mxu0 %v1189
    %1659 = vmatpush.bf16.msra.mxu0 %v1185
    %1660 = vmatpush.bf16.msra.mxu0 %v1181
    %1661 = vmatpush.bf16.msra.mxu0 %v1177
    %1662 = vmatpush.bf16.msra.mxu0 %v1173
    %1663 = vmatmul.bf16.gmra.mxu0 %v324
    %v1664 = vpop.f32.mrf.mxu0
    %v1665 = vadd.f32 %v1651, %v1664
    %v1666 = vpop.f32.mrf.mxu0
    %v1667 = vadd.f32 %v1653, %v1666
    %1668 = vdwg.mxu0
    %1669 = vmatpush.bf16.msra.mxu0 %v1233
    %1670 = vmatpush.bf16.msra.mxu0 %v1229
    %1671 = vmatpush.bf16.msra.mxu0 %v1225
    %1672 = vmatpush.bf16.msra.mxu0 %v1221
    %1673 = vmatpush.bf16.msra.mxu0 %v1217
    %1674 = vmatpush.bf16.msra.mxu0 %v1213
    %1675 = vmatpush.bf16.msra.mxu0 %v1209
    %1676 = vmatpush.bf16.msra.mxu0 %v1205
    %1677 = vmatmul.bf16.gmra.mxu0 %v325
    %v1678 = vpop.f32.mrf.mxu0
    %v1679 = vadd.f32 %v1665, %v1678
    %v1680 = vpop.f32.mrf.mxu0
    %v1681 = vadd.f32 %v1667, %v1680
    %1682 = vdwg.mxu0
    %1683 = vmatpush.bf16.msra.mxu0 %v1265
    %1684 = vmatpush.bf16.msra.mxu0 %v1261
    %1685 = vmatpush.bf16.msra.mxu0 %v1257
    %1686 = vmatpush.bf16.msra.mxu0 %v1253
    %1687 = vmatpush.bf16.msra.mxu0 %v1249
    %1688 = vmatpush.bf16.msra.mxu0 %v1245
    %1689 = vmatpush.bf16.msra.mxu0 %v1241
    %1690 = vmatpush.bf16.msra.mxu0 %v1237
    %1691 = vmatmul.bf16.gmra.mxu0 %v326
    %v1692 = vpop.f32.mrf.mxu0
    %v1693 = vadd.f32 %v1679, %v1692
    %v1694 = vpop.f32.mrf.mxu0
    %v1695 = vadd.f32 %v1681, %v1694
    %1696 = vdwg.mxu0
    %1697 = vmatpush.bf16.msra.mxu0 %v1297
    %1698 = vmatpush.bf16.msra.mxu0 %v1293
    %1699 = vmatpush.bf16.msra.mxu0 %v1289
    %1700 = vmatpush.bf16.msra.mxu0 %v1285
    %1701 = vmatpush.bf16.msra.mxu0 %v1281
    %1702 = vmatpush.bf16.msra.mxu0 %v1277
    %1703 = vmatpush.bf16.msra.mxu0 %v1273
    %1704 = vmatpush.bf16.msra.mxu0 %v1269
    %1705 = vmatmul.bf16.gmra.mxu0 %v327
    %v1706 = vpop.f32.mrf.mxu0
    %v1707 = vadd.f32 %v1693, %v1706
    %v1708 = vpop.f32.mrf.mxu0
    %v1709 = vadd.f32 %v1695, %v1708
    %1710 = vdwg.mxu0
    %1711 = vmatpush.bf16.msra.mxu0 %v1329
    %1712 = vmatpush.bf16.msra.mxu0 %v1325
    %1713 = vmatpush.bf16.msra.mxu0 %v1321
    %1714 = vmatpush.bf16.msra.mxu0 %v1317
    %1715 = vmatpush.bf16.msra.mxu0 %v1313
    %1716 = vmatpush.bf16.msra.mxu0 %v1309
    %1717 = vmatpush.bf16.msra.mxu0 %v1305
    %1718 = vmatpush.bf16.msra.mxu0 %v1301
    %1719 = vmatmul.bf16.gmra.mxu0 %v328
    %v1720 = vpop.f32.mrf.mxu0
    %v1721 = vadd.f32 %v1707, %v1720
    %v1722 = vpop.f32.mrf.mxu0
    %v1723 = vadd.f32 %v1709, %v1722
    %1724 = vdwg.mxu0
    %1725 = vmatpush.bf16.msra.mxu0 0
    %1726 = vmatpush.bf16.msra.mxu0 0
    %1727 = vmatpush.bf16.msra.mxu0 0
    %1728 = vmatpush.bf16.msra.mxu0 0
    %1729 = vmatpush.bf16.msra.mxu0 0
    %1730 = vmatpush.bf16.msra.mxu0 0
    %1731 = vmatpush.bf16.msra.mxu0 %v1337
    %1732 = vmatpush.bf16.msra.mxu0 %v1333
    %1733 = vmatmul.bf16.gmra.mxu0 %v1541
    %v1734 = vpop.f32.mrf.mxu0
    %v1735 = vadd.f32 %v1721, %v1734
    %v1736 = vpop.f32.mrf.mxu0
    %v1737 = vadd.f32 %v1723, %v1736
    %1738 = vdwg.mxu0
    %1739 = vmatpush.bf16.msra.mxu0 %v1170
    %1740 = vmatpush.bf16.msra.mxu0 %v1166
    %1741 = vmatpush.bf16.msra.mxu0 %v1162
    %1742 = vmatpush.bf16.msra.mxu0 %v1158
    %1743 = vmatpush.bf16.msra.mxu0 %v1154
    %1744 = vmatpush.bf16.msra.mxu0 %v1150
    %1745 = vmatpush.bf16.msra.mxu0 %v1146
    %1746 = vmatpush.bf16.msra.mxu0 %v1142
    %1747 = vmatmul.bf16.gmra.mxu0 %v323
    %v1748 = vpop.f32.mrf.mxu0
    %v1749 = vadd.f32 %v534, %v1748
    %v1750 = vpop.f32.mrf.mxu0
    %v1751 = vadd.f32 %v534, %v1750
    %1752 = vdwg.mxu0
    %1753 = vmatpush.bf16.msra.mxu0 %v1202
    %1754 = vmatpush.bf16.msra.mxu0 %v1198
    %1755 = vmatpush.bf16.msra.mxu0 %v1194
    %1756 = vmatpush.bf16.msra.mxu0 %v1190
    %1757 = vmatpush.bf16.msra.mxu0 %v1186
    %1758 = vmatpush.bf16.msra.mxu0 %v1182
    %1759 = vmatpush.bf16.msra.mxu0 %v1178
    %1760 = vmatpush.bf16.msra.mxu0 %v1174
    %1761 = vmatmul.bf16.gmra.mxu0 %v324
    %v1762 = vpop.f32.mrf.mxu0
    %v1763 = vadd.f32 %v1749, %v1762
    %v1764 = vpop.f32.mrf.mxu0
    %v1765 = vadd.f32 %v1751, %v1764
    %1766 = vdwg.mxu0
    %1767 = vmatpush.bf16.msra.mxu0 %v1234
    %1768 = vmatpush.bf16.msra.mxu0 %v1230
    %1769 = vmatpush.bf16.msra.mxu0 %v1226
    %1770 = vmatpush.bf16.msra.mxu0 %v1222
    %1771 = vmatpush.bf16.msra.mxu0 %v1218
    %1772 = vmatpush.bf16.msra.mxu0 %v1214
    %1773 = vmatpush.bf16.msra.mxu0 %v1210
    %1774 = vmatpush.bf16.msra.mxu0 %v1206
    %1775 = vmatmul.bf16.gmra.mxu0 %v325
    %v1776 = vpop.f32.mrf.mxu0
    %v1777 = vadd.f32 %v1763, %v1776
    %v1778 = vpop.f32.mrf.mxu0
    %v1779 = vadd.f32 %v1765, %v1778
    %1780 = vdwg.mxu0
    %1781 = vmatpush.bf16.msra.mxu0 %v1266
    %1782 = vmatpush.bf16.msra.mxu0 %v1262
    %1783 = vmatpush.bf16.msra.mxu0 %v1258
    %1784 = vmatpush.bf16.msra.mxu0 %v1254
    %1785 = vmatpush.bf16.msra.mxu0 %v1250
    %1786 = vmatpush.bf16.msra.mxu0 %v1246
    %1787 = vmatpush.bf16.msra.mxu0 %v1242
    %1788 = vmatpush.bf16.msra.mxu0 %v1238
    %1789 = vmatmul.bf16.gmra.mxu0 %v326
    %v1790 = vpop.f32.mrf.mxu0
    %v1791 = vadd.f32 %v1777, %v1790
    %v1792 = vpop.f32.mrf.mxu0
    %v1793 = vadd.f32 %v1779, %v1792
    %1794 = vdwg.mxu0
    %1795 = vmatpush.bf16.msra.mxu0 %v1298
    %1796 = vmatpush.bf16.msra.mxu0 %v1294
    %1797 = vmatpush.bf16.msra.mxu0 %v1290
    %1798 = vmatpush.bf16.msra.mxu0 %v1286
    %1799 = vmatpush.bf16.msra.mxu0 %v1282
    %1800 = vmatpush.bf16.msra.mxu0 %v1278
    %1801 = vmatpush.bf16.msra.mxu0 %v1274
    %1802 = vmatpush.bf16.msra.mxu0 %v1270
    %1803 = vmatmul.bf16.gmra.mxu0 %v327
    %v1804 = vpop.f32.mrf.mxu0
    %v1805 = vadd.f32 %v1791, %v1804
    %v1806 = vpop.f32.mrf.mxu0
    %v1807 = vadd.f32 %v1793, %v1806
    %1808 = vdwg.mxu0
    %1809 = vmatpush.bf16.msra.mxu0 %v1330
    %1810 = vmatpush.bf16.msra.mxu0 %v1326
    %1811 = vmatpush.bf16.msra.mxu0 %v1322
    %1812 = vmatpush.bf16.msra.mxu0 %v1318
    %1813 = vmatpush.bf16.msra.mxu0 %v1314
    %1814 = vmatpush.bf16.msra.mxu0 %v1310
    %1815 = vmatpush.bf16.msra.mxu0 %v1306
    %1816 = vmatpush.bf16.msra.mxu0 %v1302
    %1817 = vmatmul.bf16.gmra.mxu0 %v328
    %v1818 = vpop.f32.mrf.mxu0
    %v1819 = vadd.f32 %v1805, %v1818
    %v1820 = vpop.f32.mrf.mxu0
    %v1821 = vadd.f32 %v1807, %v1820
    %1822 = vdwg.mxu0
    %1823 = vmatpush.bf16.msra.mxu0 0
    %1824 = vmatpush.bf16.msra.mxu0 0
    %1825 = vmatpush.bf16.msra.mxu0 0
    %1826 = vmatpush.bf16.msra.mxu0 0
    %1827 = vmatpush.bf16.msra.mxu0 0
    %1828 = vmatpush.bf16.msra.mxu0 0
    %1829 = vmatpush.bf16.msra.mxu0 %v1338
    %1830 = vmatpush.bf16.msra.mxu0 %v1334
    %1831 = vmatmul.bf16.gmra.mxu0 %v1541
    %v1832 = vpop.f32.mrf.mxu0
    %v1833 = vadd.f32 %v1819, %v1832
    %v1834 = vpop.f32.mrf.mxu0
    %v1835 = vadd.f32 %v1821, %v1834
    %1836 = vdwg.mxu0
    %1837 = vmatpush.bf16.msra.mxu0 %v1171
    %1838 = vmatpush.bf16.msra.mxu0 %v1167
    %1839 = vmatpush.bf16.msra.mxu0 %v1163
    %1840 = vmatpush.bf16.msra.mxu0 %v1159
    %1841 = vmatpush.bf16.msra.mxu0 %v1155
    %1842 = vmatpush.bf16.msra.mxu0 %v1151
    %1843 = vmatpush.bf16.msra.mxu0 %v1147
    %1844 = vmatpush.bf16.msra.mxu0 %v1143
    %1845 = vmatmul.bf16.gmra.mxu0 %v323
    %v1846 = vpop.f32.mrf.mxu0
    %v1847 = vadd.f32 %v535, %v1846
    %v1848 = vpop.f32.mrf.mxu0
    %v1849 = vadd.f32 %v535, %v1848
    %1850 = vdwg.mxu0
    %1851 = vmatpush.bf16.msra.mxu0 %v1203
    %1852 = vmatpush.bf16.msra.mxu0 %v1199
    %1853 = vmatpush.bf16.msra.mxu0 %v1195
    %1854 = vmatpush.bf16.msra.mxu0 %v1191
    %1855 = vmatpush.bf16.msra.mxu0 %v1187
    %1856 = vmatpush.bf16.msra.mxu0 %v1183
    %1857 = vmatpush.bf16.msra.mxu0 %v1179
    %1858 = vmatpush.bf16.msra.mxu0 %v1175
    %1859 = vmatmul.bf16.gmra.mxu0 %v324
    %v1860 = vpop.f32.mrf.mxu0
    %v1861 = vadd.f32 %v1847, %v1860
    %v1862 = vpop.f32.mrf.mxu0
    %v1863 = vadd.f32 %v1849, %v1862
    %1864 = vdwg.mxu0
    %1865 = vmatpush.bf16.msra.mxu0 %v1235
    %1866 = vmatpush.bf16.msra.mxu0 %v1231
    %1867 = vmatpush.bf16.msra.mxu0 %v1227
    %1868 = vmatpush.bf16.msra.mxu0 %v1223
    %1869 = vmatpush.bf16.msra.mxu0 %v1219
    %1870 = vmatpush.bf16.msra.mxu0 %v1215
    %1871 = vmatpush.bf16.msra.mxu0 %v1211
    %1872 = vmatpush.bf16.msra.mxu0 %v1207
    %1873 = vmatmul.bf16.gmra.mxu0 %v325
    %v1874 = vpop.f32.mrf.mxu0
    %v1875 = vadd.f32 %v1861, %v1874
    %v1876 = vpop.f32.mrf.mxu0
    %v1877 = vadd.f32 %v1863, %v1876
    %1878 = vdwg.mxu0
    %1879 = vmatpush.bf16.msra.mxu0 %v1267
    %1880 = vmatpush.bf16.msra.mxu0 %v1263
    %1881 = vmatpush.bf16.msra.mxu0 %v1259
    %1882 = vmatpush.bf16.msra.mxu0 %v1255
    %1883 = vmatpush.bf16.msra.mxu0 %v1251
    %1884 = vmatpush.bf16.msra.mxu0 %v1247
    %1885 = vmatpush.bf16.msra.mxu0 %v1243
    %1886 = vmatpush.bf16.msra.mxu0 %v1239
    %1887 = vmatmul.bf16.gmra.mxu0 %v326
    %v1888 = vpop.f32.mrf.mxu0
    %v1889 = vadd.f32 %v1875, %v1888
    %v1890 = vpop.f32.mrf.mxu0
    %v1891 = vadd.f32 %v1877, %v1890
    %1892 = vdwg.mxu0
    %1893 = vmatpush.bf16.msra.mxu0 %v1299
    %1894 = vmatpush.bf16.msra.mxu0 %v1295
    %1895 = vmatpush.bf16.msra.mxu0 %v1291
    %1896 = vmatpush.bf16.msra.mxu0 %v1287
    %1897 = vmatpush.bf16.msra.mxu0 %v1283
    %1898 = vmatpush.bf16.msra.mxu0 %v1279
    %1899 = vmatpush.bf16.msra.mxu0 %v1275
    %1900 = vmatpush.bf16.msra.mxu0 %v1271
    %1901 = vmatmul.bf16.gmra.mxu0 %v327
    %v1902 = vpop.f32.mrf.mxu0
    %v1903 = vadd.f32 %v1889, %v1902
    %v1904 = vpop.f32.mrf.mxu0
    %v1905 = vadd.f32 %v1891, %v1904
    %1906 = vdwg.mxu0
    %1907 = vmatpush.bf16.msra.mxu0 %v1331
    %1908 = vmatpush.bf16.msra.mxu0 %v1327
    %1909 = vmatpush.bf16.msra.mxu0 %v1323
    %1910 = vmatpush.bf16.msra.mxu0 %v1319
    %1911 = vmatpush.bf16.msra.mxu0 %v1315
    %1912 = vmatpush.bf16.msra.mxu0 %v1311
    %1913 = vmatpush.bf16.msra.mxu0 %v1307
    %1914 = vmatpush.bf16.msra.mxu0 %v1303
    %1915 = vmatmul.bf16.gmra.mxu0 %v328
    %v1916 = vpop.f32.mrf.mxu0
    %v1917 = vadd.f32 %v1903, %v1916
    %v1918 = vpop.f32.mrf.mxu0
    %v1919 = vadd.f32 %v1905, %v1918
    %1920 = vdwg.mxu0
    %1921 = vmatpush.bf16.msra.mxu0 0
    %1922 = vmatpush.bf16.msra.mxu0 0
    %1923 = vmatpush.bf16.msra.mxu0 0
    %1924 = vmatpush.bf16.msra.mxu0 0
    %1925 = vmatpush.bf16.msra.mxu0 0
    %1926 = vmatpush.bf16.msra.mxu0 0
    %1927 = vmatpush.bf16.msra.mxu0 %v1339
    %1928 = vmatpush.bf16.msra.mxu0 %v1335
    %1929 = vmatmul.bf16.gmra.mxu0 %v1541
    %v1930 = vpop.f32.mrf.mxu0
    %v1931 = vadd.f32 %v1917, %v1930
    %v1932 = vpop.f32.mrf.mxu0
    %v1933 = vadd.f32 %v1919, %v1932
    %1934 = vdwg.mxu0
    %v1935 = vmax.f32 %v1637, 0.0
    %v1936 = vmax.f32 %v1735, 0.0
    %v1937 = vmax.f32 %v1833, 0.0
    %v1938 = vmax.f32 %v1931, 0.0
    %v1939 = vmax.f32 %v1639, 0.0
    %v1940 = vmax.f32 %v1737, 0.0
    %v1941 = vmax.f32 %v1835, 0.0
    %v1942 = vmax.f32 %v1933, 0.0
    %v1943 = vpack.c.bf16 %v1939, %v1935
    %v1944 = vpack.c.bf16 %v1940, %v1936
    %v1945 = vpack.c.bf16 %v1941, %v1937
    %v1946 = vpack.c.bf16 %v1942, %v1938
    %v1947 = vld [vmem:[%s7] sm:$0xf]
    %v1948 = vld [vmem:[%s7 + $0x4] sm:$0xf]
    %v1949 = vld [vmem:[%s7 + $0x8] sm:$0xf]
    %v1950 = vld [vmem:[%s7 + $0xc] sm:$0xf]
    %v1951 = vld [vmem:[%s7 + $0x10] sm:$0xf]
    %v1952 = vld [vmem:[%s7 + $0x14] sm:$0xf]
    %v1953 = vld [vmem:[%s7 + $0x18] sm:$0xf]
    %v1954 = vld [vmem:[%s7 + $0x1c] sm:$0xf]
    %v1955 = vld [vmem:[%s7 + $0x20] sm:$0xf]
    %v1956 = vld [vmem:[%s7 + $0x24] sm:$0xf]
    %v1957 = vld [vmem:[%s7 + $0x28] sm:$0xf]
    %v1958 = vld [vmem:[%s7 + $0x2c] sm:$0xf]
    %v1959 = vld [vmem:[%s7 + $0x30] sm:$0xf]
    %v1960 = vld [vmem:[%s7 + $0x34] sm:$0xf]
    %v1961 = vld [vmem:[%s7 + $0x38] sm:$0xf]
    %v1962 = vld [vmem:[%s7 + $0x3c] sm:$0xf]
    %v1963 = vld [vmem:[%s7 + $0x40] sm:$0xf]
    %v1964 = vld [vmem:[%s7 + $0x44] sm:$0xf]
    %v1965 = vld [vmem:[%s7 + $0x48] sm:$0xf]
    %v1966 = vld [vmem:[%s7 + $0x4c] sm:$0xf]
    %v1967 = vld [vmem:[%s7 + $0x50] sm:$0xf]
    %v1968 = vld [vmem:[%s7 + $0x54] sm:$0xf]
    %v1969 = vld [vmem:[%s7 + $0x58] sm:$0xf]
    %v1970 = vld [vmem:[%s7 + $0x5c] sm:$0xf]
    %v1971 = vld [vmem:[%s7 + $0x60] sm:$0xf]
    %v1972 = vld [vmem:[%s7 + $0x64] sm:$0xf]
    %v1973 = vld [vmem:[%s7 + $0x68] sm:$0xf]
    %v1974 = vld [vmem:[%s7 + $0x6c] sm:$0xf]
    %v1975 = vld [vmem:[%s7 + $0x70] sm:$0xf]
    %v1976 = vld [vmem:[%s7 + $0x74] sm:$0xf]
    %v1977 = vld [vmem:[%s7 + $0x78] sm:$0xf]
    %v1978 = vld [vmem:[%s7 + $0x7c] sm:$0xf]
    %v1979 = vld [vmem:[%s7 + $0x80] sm:$0xf]
    %v1980 = vld [vmem:[%s7 + $0x84] sm:$0xf]
    %v1981 = vld [vmem:[%s7 + $0x88] sm:$0xf]
    %v1982 = vld [vmem:[%s7 + $0x8c] sm:$0xf]
    %v1983 = vld [vmem:[%s7 + $0x90] sm:$0xf]
    %v1984 = vld [vmem:[%s7 + $0x94] sm:$0xf]
    %v1985 = vld [vmem:[%s7 + $0x98] sm:$0xf]
    %v1986 = vld [vmem:[%s7 + $0x9c] sm:$0xf]
    %v1987 = vld [vmem:[%s7 + $0xa0] sm:$0xf]
    %v1988 = vld [vmem:[%s7 + $0xa4] sm:$0xf]
    %v1989 = vld [vmem:[%s7 + $0xa8] sm:$0xf]
    %v1990 = vld [vmem:[%s7 + $0xac] sm:$0xf]
    %v1991 = vld [vmem:[%s7 + $0xb0] sm:$0xf]
    %v1992 = vld [vmem:[%s7 + $0xb4] sm:$0xf]
    %v1993 = vld [vmem:[%s7 + $0xb8] sm:$0xf]
    %v1994 = vld [vmem:[%s7 + $0xbc] sm:$0xf]
    %v1995 = vld [vmem:[%s7 + $0xc0] sm:$0xf]
    %v1996 = vld [vmem:[%s7 + $0xc4] sm:$0xf]
    %v1997 = vld [vmem:[%s7 + $0xc8] sm:$0xf]
    %v1998 = vld [vmem:[%s7 + $0xcc] sm:$0xf]
    %v1999 = vld [vmem:[%s7 + $0xd0] sm:$0xf]
    %v2000 = vld [vmem:[%s7 + $0xd4] sm:$0xf]
    %v2001 = vld [vmem:[%s7 + $0xd8] sm:$0xf]
    %v2002 = vld [vmem:[%s7 + $0xdc] sm:$0xf]
    %v2003 = vld [vmem:[%s7 + $0xe0] sm:$0xf]
    %v2004 = vld [vmem:[%s7 + $0xe4] sm:$0xf]
    %v2005 = vld [vmem:[%s7 + $0xe8] sm:$0xf]
    %v2006 = vld [vmem:[%s7 + $0xec] sm:$0xf]
    %v2007 = vld [vmem:[%s7 + $0xf0] sm:$0xf]
    %v2008 = vld [vmem:[%s7 + $0xf4] sm:$0xf]
    %v2009 = vld [vmem:[%s7 + $0xf8] sm:$0xf]
    %v2010 = vld [vmem:[%s7 + $0xfc] sm:$0xf]
    %v2011 = vld [vmem:[%s8] sm:$0x1]
    %v2013 = vperm.slane %v2011, 0
    %v2079 = vunpack.c.l.b16 %v1947
    %v2080 = vunpack.c.l.b16 %v1948
    %v2081 = vunpack.c.l.b16 %v1949
    %v2082 = vunpack.c.l.b16 %v1950
    %v2083 = vunpack.c.l.b16 %v1951
    %v2084 = vunpack.c.l.b16 %v1952
    %v2085 = vunpack.c.l.b16 %v1953
    %v2086 = vunpack.c.l.b16 %v1954
    %v2087 = vunpack.c.l.b16 %v1955
    %v2088 = vunpack.c.l.b16 %v1956
    %v2089 = vunpack.c.l.b16 %v1957
    %v2090 = vunpack.c.l.b16 %v1958
    %v2091 = vunpack.c.l.b16 %v1959
    %v2092 = vunpack.c.l.b16 %v1960
    %v2093 = vunpack.c.l.b16 %v1961
    %v2094 = vunpack.c.l.b16 %v1962
    %v2095 = vunpack.c.l.b16 %v1963
    %v2096 = vunpack.c.l.b16 %v1964
    %v2097 = vunpack.c.l.b16 %v1965
    %v2098 = vunpack.c.l.b16 %v1966
    %v2099 = vunpack.c.l.b16 %v1967
    %v2100 = vunpack.c.l.b16 %v1968
    %v2101 = vunpack.c.l.b16 %v1969
    %v2102 = vunpack.c.l.b16 %v1970
    %v2103 = vunpack.c.l.b16 %v1971
    %v2104 = vunpack.c.l.b16 %v1972
    %v2105 = vunpack.c.l.b16 %v1973
    %v2106 = vunpack.c.l.b16 %v1974
    %v2107 = vunpack.c.l.b16 %v1975
    %v2108 = vunpack.c.l.b16 %v1976
    %v2109 = vunpack.c.l.b16 %v1977
    %v2110 = vunpack.c.l.b16 %v1978
    %v2111 = vunpack.c.l.b16 %v1979
    %v2112 = vunpack.c.l.b16 %v1980
    %v2113 = vunpack.c.l.b16 %v1981
    %v2114 = vunpack.c.l.b16 %v1982
    %v2115 = vunpack.c.l.b16 %v1983
    %v2116 = vunpack.c.l.b16 %v1984
    %v2117 = vunpack.c.l.b16 %v1985
    %v2118 = vunpack.c.l.b16 %v1986
    %v2119 = vunpack.c.l.b16 %v1987
    %v2120 = vunpack.c.l.b16 %v1988
    %v2121 = vunpack.c.l.b16 %v1989
    %v2122 = vunpack.c.l.b16 %v1990
    %v2123 = vunpack.c.l.b16 %v1991
    %v2124 = vunpack.c.l.b16 %v1992
    %v2125 = vunpack.c.l.b16 %v1993
    %v2126 = vunpack.c.l.b16 %v1994
    %v2127 = vunpack.c.l.b16 %v1995
    %v2128 = vunpack.c.l.b16 %v1996
    %v2129 = vunpack.c.l.b16 %v1997
    %v2130 = vunpack.c.l.b16 %v1998
    %v2131 = vunpack.c.l.b16 %v1999
    %v2132 = vunpack.c.l.b16 %v2000
    %v2133 = vunpack.c.l.b16 %v2001
    %v2134 = vunpack.c.l.b16 %v2002
    %v2135 = vunpack.c.l.b16 %v2003
    %v2136 = vunpack.c.l.b16 %v2004
    %v2137 = vunpack.c.l.b16 %v2005
    %v2138 = vunpack.c.l.b16 %v2006
    %v2139 = vunpack.c.l.b16 %v2007
    %v2140 = vunpack.c.l.b16 %v2008
    %v2141 = vunpack.c.l.b16 %v2009
    %v2142 = vunpack.c.l.b16 %v2010
    %v2143 = vpack.c.b16 %v2080, %v2079
    %v2144 = vpack.c.b16 %v2082, %v2081
    %v2145 = vpack.c.b16 %v2084, %v2083
    %v2146 = vpack.c.b16 %v2086, %v2085
    %v2147 = vpack.c.b16 %v2088, %v2087
    %v2148 = vpack.c.b16 %v2090, %v2089
    %v2149 = vpack.c.b16 %v2092, %v2091
    %v2150 = vpack.c.b16 %v2094, %v2093
    %v2151 = vpack.c.b16 %v2096, %v2095
    %v2152 = vpack.c.b16 %v2098, %v2097
    %v2153 = vpack.c.b16 %v2100, %v2099
    %v2154 = vpack.c.b16 %v2102, %v2101
    %v2155 = vpack.c.b16 %v2104, %v2103
    %v2156 = vpack.c.b16 %v2106, %v2105
    %v2157 = vpack.c.b16 %v2108, %v2107
    %v2158 = vpack.c.b16 %v2110, %v2109
    %v2159 = vpack.c.b16 %v2112, %v2111
    %v2160 = vpack.c.b16 %v2114, %v2113
    %v2161 = vpack.c.b16 %v2116, %v2115
    %v2162 = vpack.c.b16 %v2118, %v2117
    %v2163 = vpack.c.b16 %v2120, %v2119
    %v2164 = vpack.c.b16 %v2122, %v2121
    %v2165 = vpack.c.b16 %v2124, %v2123
    %v2166 = vpack.c.b16 %v2126, %v2125
    %v2167 = vpack.c.b16 %v2128, %v2127
    %v2168 = vpack.c.b16 %v2130, %v2129
    %v2169 = vpack.c.b16 %v2132, %v2131
    %v2170 = vpack.c.b16 %v2134, %v2133
    %v2171 = vpack.c.b16 %v2136, %v2135
    %v2172 = vpack.c.b16 %v2138, %v2137
    %v2173 = vpack.c.b16 %v2140, %v2139
    %v2174 = vpack.c.b16 %v2142, %v2141
    %2207 = vmatpush.bf16.msra.mxu0 %v2150
    %2208 = vmatpush.bf16.msra.mxu0 %v2149
    %2209 = vmatpush.bf16.msra.mxu0 %v2148
    %2210 = vmatpush.bf16.msra.mxu0 %v2147
    %2211 = vmatpush.bf16.msra.mxu0 %v2146
    %2212 = vmatpush.bf16.msra.mxu0 %v2145
    %2213 = vmatpush.bf16.msra.mxu0 %v2144
    %2214 = vmatpush.bf16.msra.mxu0 %v2143
    %2215 = vmatmul.bf16.gmra.mxu0 %v1943
    %v2216 = vpop.f32.mrf.mxu0
    %v2217 = vadd.f32 %v2013, %v2216
    %v2218 = vpop.f32.mrf.mxu0
    %v2219 = vadd.f32 %v2013, %v2218
    %2220 = vdwg.mxu0
    %2221 = vmatpush.bf16.msra.mxu0 %v2158
    %2222 = vmatpush.bf16.msra.mxu0 %v2157
    %2223 = vmatpush.bf16.msra.mxu0 %v2156
    %2224 = vmatpush.bf16.msra.mxu0 %v2155
    %2225 = vmatpush.bf16.msra.mxu0 %v2154
    %2226 = vmatpush.bf16.msra.mxu0 %v2153
    %2227 = vmatpush.bf16.msra.mxu0 %v2152
    %2228 = vmatpush.bf16.msra.mxu0 %v2151
    %2229 = vmatmul.bf16.gmra.mxu0 %v1944
    %v2230 = vpop.f32.mrf.mxu0
    %v2231 = vadd.f32 %v2217, %v2230
    %v2232 = vpop.f32.mrf.mxu0
    %v2233 = vadd.f32 %v2219, %v2232
    %2234 = vdwg.mxu0
    %2235 = vmatpush.bf16.msra.mxu0 %v2166
    %2236 = vmatpush.bf16.msra.mxu0 %v2165
    %2237 = vmatpush.bf16.msra.mxu0 %v2164
    %2238 = vmatpush.bf16.msra.mxu0 %v2163
    %2239 = vmatpush.bf16.msra.mxu0 %v2162
    %2240 = vmatpush.bf16.msra.mxu0 %v2161
    %2241 = vmatpush.bf16.msra.mxu0 %v2160
    %2242 = vmatpush.bf16.msra.mxu0 %v2159
    %2243 = vmatmul.bf16.gmra.mxu0 %v1945
    %v2244 = vpop.f32.mrf.mxu0
    %v2245 = vadd.f32 %v2231, %v2244
    %v2246 = vpop.f32.mrf.mxu0
    %v2247 = vadd.f32 %v2233, %v2246
    %2248 = vdwg.mxu0
    %2249 = vmatpush.bf16.msra.mxu0 %v2174
    %2250 = vmatpush.bf16.msra.mxu0 %v2173
    %2251 = vmatpush.bf16.msra.mxu0 %v2172
    %2252 = vmatpush.bf16.msra.mxu0 %v2171
    %2253 = vmatpush.bf16.msra.mxu0 %v2170
    %2254 = vmatpush.bf16.msra.mxu0 %v2169
    %2255 = vmatpush.bf16.msra.mxu0 %v2168
    %2256 = vmatpush.bf16.msra.mxu0 %v2167
    %2257 = vmatmul.bf16.gmra.mxu0 %v1946
    %v2258 = vpop.f32.mrf.mxu0
    %v2259 = vadd.f32 %v2245, %v2258
    %v2260 = vpop.f32.mrf.mxu0
    %v2261 = vadd.f32 %v2247, %v2260
    %2262 = vdwg.mxu0
    %v2263 = vmax.f32 %v2259, 0.0
    %v2264 = vmax.f32 %v2261, 0.0
    %v2265 = vpack.c.bf16 %v2264, %v2263
    %v2266 = vld [vmem:[%s9] sm:$0xf]
    %v2267 = vld [vmem:[%s9 + $0x4] sm:$0xf]
    %v2268 = vld [vmem:[%s9 + $0x8] sm:$0xf]
    %v2269 = vld [vmem:[%s9 + $0xc] sm:$0xf]
    %v2270 = vld [vmem:[%s10] sm:$0x1]
    %v2272 = vperm.slane %v2270, 0
    %v2278 = vunpack.c.l.b16 %v2266
    %v2279 = vunpack.c.l.b16 %v2267
    %v2280 = vunpack.c.l.b16 %v2268
    %v2281 = vunpack.c.l.b16 %v2269
    %v2282 = vpack.c.b16 %v2279, %v2278
    %v2283 = vpack.c.b16 %v2281, %v2280
    %v2287 = vsel %vm83, %v2265, 0
    %2289 = vmatpush.bf16.msra.mxu0 0
    %2290 = vmatpush.bf16.msra.mxu0 0
    %2291 = vmatpush.bf16.msra.mxu0 0
    %2292 = vmatpush.bf16.msra.mxu0 0
    %2293 = vmatpush.bf16.msra.mxu0 0
    %2294 = vmatpush.bf16.msra.mxu0 0
    %2295 = vmatpush.bf16.msra.mxu0 %v2283
    %2296 = vmatpush.bf16.msra.mxu0 %v2282
    %2297 = vmatmul.bf16.gmra.mxu0 %v2287
    %v2298 = vpop.f32.mrf.mxu0
    %v2299 = vadd.f32 %v2272, %v2298
    %v2300 = vpop.f32.mrf.mxu0
    %v2301 = vadd.f32 %v2272, %v2300
    %2302 = vdwg.mxu0
    %2303 = vst [vmem:[#allocation5] sm:$0xff] %v2299
    %2304 = vst [vmem:[#allocation5 + $0x8] sm:$0xff] %v2301
    // Predicated region
    $region50: #{tpu_custom_call.1} parent=1 // pred_check
      _
    $region51: #{tpu_custom_call.1} parent=1 // pred_check_branch
      %2306 = sbr.rel (0) target = $region53
    $region52: #{tpu_custom_call.1} parent=1 // pred_region
      %2308 = vsyncadd [#allocation4], 0
      %s2309 = sshll.u32 [#allocation5], 4
      %s2310 = int_to_ptr.vmem [resolvable:$true] %s2309
      %s2311 = sshll.u32 %s11, 4
      %s2312 = int_to_ptr.hbm [resolvable:$true] %s2311
      %2317 = dma.vmem_to_hbm [thread:$0]  %s2310, 256, %s2312, [#allocation4], 128, 128, 8
    $region53: #{tpu_custom_call.1} parent=1 // pred_fallthru
      _
    // Predicated region
    $region54: #{tpu_custom_call.1} parent=1 // pred_check
      _
    $region55: #{tpu_custom_call.1} parent=1 // pred_check_branch
      %2319 = sbr.rel (0) target = $region57
    $region56: #{tpu_custom_call.1} parent=1 // pred_region
      %2321 = dma.done [#allocation4], 256
    $region57: #{tpu_custom_call.1} parent=1 // pred_fallthru
      _
    %2322 = vsyncpa [#allocation3], 1
    %2323 = vsyncpa [#allocation4], 1

</llo_original>
